<compile_context>
chip_gen: v6e
topology: v6e:2x2x1
jax: 0.10.0
libtpu: 0.0.40
codegen_flags: <defaults>
</compile_context>

<pallas_src>
import functools

import jax
import jax.numpy as jnp
from jax.experimental import pallas as pl
from jax.experimental.pallas import tpu as pltpu

LANES = 128
SMALL_N = 65536                     # below this a fused XLA reduction wins
VMEM_LIMIT_BYTES = 48 * 1024 * 1024  # well under v7x's 64 MiB physical VMEM


def _round_up(x, m):
    return ((x + m - 1) // m) * m


def _device_config():
    """(num_cores, max_tile_rows) tuned per TPU generation."""
    kind = ""
    try:
        kind = jax.devices()[0].device_kind.lower()
    except Exception:  # defensive: fall back to conservative single-core config
        pass
    # Chips with 2 TensorCores per chip (megacore / v7x) benefit from the leading
    # "parallel" core-split axis; single-TC chips (v5e/v6e) do not.
    dual_tc = any(tag in kind for tag in ("v4", "v5p", "7x", "v7"))
    num_cores = 2 if dual_tc else 1
    # Per-input per-pipeline-buffer tile: 4 MiB (f32) by default, 2 MiB on v5e
    # (slower HBM already amortizes the ~0.35 us per-step overhead at 2 MiB).
    if "v5 lite" in kind or "v5e" in kind or "v5lite" in kind:
        max_tile_rows = 4096
    else:
        max_tile_rows = 8192
    return num_cores, max_tile_rows


def _sse_partial_kernel(preds_ref, targets_ref, out_ref, acc_ref, *,
                        tiles_per_core, tile_rows, valid_rows):
    """Accumulate per-lane partial sums of (preds - targets)^2 for one core slice."""
    c = pl.program_id(0)
    i = pl.program_id(1)

    @pl.when(i == 0)
    def _init():
        acc_ref[...] = jnp.zeros_like(acc_ref)

    p = preds_ref[...].astype(jnp.float32)
    t = targets_ref[...].astype(jnp.float32)

    # Mask rows past the true extent (the grid's last block may overshoot the
    # array; Pallas pads OOB input reads with undefined values, so zero them).
    row0 = (c * tiles_per_core + i) * tile_rows
    row_ids = row0 + jax.lax.broadcasted_iota(jnp.int32, p.shape, 0)
    d = jnp.where(row_ids < valid_rows, p - t, 0.0)

    # Keep the loop-carried accumulator fully vectorized (pure VPU, no per-step
    # cross-lane reduce): fold (tile_rows, 128) -> (tile_rows//8, 8, 128), sum axis 0.
    acc_ref[...] += jnp.sum((d * d).reshape(tile_rows // 8, 8, LANES), axis=0)

    @pl.when(i == pl.num_programs(1) - 1)
    def _finalize():
        out_ref[...] = acc_ref[...]


def _sse_pallas(preds, targets):
    """sum((preds - targets)^2) over flat 1-D inputs via a streaming Pallas kernel."""
    n = preds.shape[0]
    num_cores, max_tile_rows = _device_config()

    # Lane-dense (rows, 128) view.  When n % 128 == 0 this reshape is free (no
    # HBM copy); otherwise pad only the tail to the next lane multiple (the
    # zero padding contributes 0 to the SSE).
    rem = n % LANES
    if rem:
        pad = LANES - rem
        preds = jnp.pad(preds, (0, pad))
        targets = jnp.pad(targets, (0, pad))
    rows = preds.shape[0] // LANES
    preds2d = preds.reshape(rows, LANES)
    targets2d = targets.reshape(rows, LANES)

    # Balanced tiling: pick the tile count first, then the 8-aligned tile size,
    # so the last tile per core is not mostly padding.
    rows_per_core = pl.cdiv(rows, num_cores)
    tiles_per_core = max(pl.cdiv(rows_per_core, max_tile_rows), 1)
    tile_rows = _round_up(pl.cdiv(rows_per_core, tiles_per_core), 8)
    if tile_rows > rows:
        # Only possible when num_cores * tiles_per_core == 1: split once more so
        # every block's shape stays within the array's row extent.
        tiles_per_core += 1
        tile_rows = _round_up(pl.cdiv(rows_per_core, tiles_per_core), 8)

    kernel = functools.partial(
        _sse_partial_kernel,
        tiles_per_core=tiles_per_core,
        tile_rows=tile_rows,
        valid_rows=rows,
    )

    in_map = lambda c, i: (c * tiles_per_core + i, 0)

    partials = pl.pallas_call(
        kernel,
        out_shape=jax.ShapeDtypeStruct((num_cores * 8, LANES), jnp.float32),
        grid=(num_cores, tiles_per_core),
        in_specs=[
            pl.BlockSpec((tile_rows, LANES), in_map),
            pl.BlockSpec((tile_rows, LANES), in_map),
        ],
        out_specs=pl.BlockSpec((8, LANES), lambda c, i: (c, 0)),
        scratch_shapes=[pltpu.VMEM((8, LANES), jnp.float32)],
        compiler_params=pltpu.CompilerParams(
            dimension_semantics=("parallel", "arbitrary"),
            vmem_limit_bytes=VMEM_LIMIT_BYTES,
        ),
    )(preds2d, targets2d)

    return jnp.sum(partials, dtype=jnp.float32)


def diffpool_regression_loss(targets, preds, lp_loss, ent_loss, reduction="mean"):
    """JAX/Pallas equivalent of DiffPoolRegressionLoss.forward."""
    preds = jnp.asarray(preds).reshape(-1)

    targets = jnp.asarray(targets)
    if targets.ndim > 1 and targets.shape[1] == 1:
        targets = jnp.squeeze(targets, axis=1)
    targets = targets.reshape(-1)   # cast to f32 (targets.float()) happens in-kernel

    n = preds.shape[0]
    assert targets.shape[0] == n, (targets.shape, preds.shape)

    if reduction not in ("mean", "sum"):
        # TODO(synk): reduction='none' (per-element loss vector) is not expressible
        # as this scalar-reduction kernel.
        raise NotImplementedError(f"unsupported reduction: {reduction}")

    if n == 0:
        # nn.MSELoss(reduction='mean') on empty input yields NaN; 'sum' yields 0.
        mse = jnp.float32(jnp.nan) if reduction == "mean" else jnp.float32(0.0)
    elif n < SMALL_N:
        # Typical DiffPool regression batches are tiny: a fused XLA reduction beats
        # kernel launch + layout plumbing.
        d = preds.astype(jnp.float32) - targets.astype(jnp.float32)
        sse = jnp.sum(d * d)
        mse = sse / n if reduction == "mean" else sse
    else:
        sse = _sse_pallas(preds, targets)
        mse = sse / n if reduction == "mean" else sse

    lp = jnp.asarray(lp_loss, jnp.float32).reshape(())
    ent = jnp.asarray(ent_loss, jnp.float32).reshape(())
    return mse + lp + ent


def _reference(targets, preds, lp_loss, ent_loss):
    # Pure-JAX reference for a sanity check.
    p = jnp.asarray(preds, jnp.float32).reshape(-1)
    t = jnp.asarray(targets)
    if t.ndim > 1 and t.shape[1] == 1:
        t = jnp.squeeze(t, axis=1)
    t = t.astype(jnp.float32).reshape(-1)
    return jnp.mean((p - t) ** 2) + jnp.float32(lp_loss) + jnp.float32(ent_loss)


if __name__ == "__main__":
    key = jax.random.PRNGKey(0)
    k1, k2, k3, k4, k5, k6, k7, k8 = jax.random.split(key, 8)

    # Module-scale example: DiffPool regression batch of 8 (small-N fast path).
    B = 8
    preds = jax.random.normal(k1, (B, 1), dtype=jnp.float32)     # model outputs
    targets = jax.random.normal(k2, (B, 1), dtype=jnp.float32)   # regression targets
    lp_loss = jnp.abs(jax.random.normal(k3, (), dtype=jnp.float32))
    ent_loss = jnp.abs(jax.random.normal(k4, (), dtype=jnp.float32))

    loss = diffpool_regression_loss(targets, preds, lp_loss, ent_loss)
    jax.block_until_ready(loss)
    ref = _reference(targets, preds, lp_loss, ent_loss)
    assert jnp.allclose(loss, ref, atol=1e-5, rtol=1e-5), (loss, ref)

    # Large batch, n % 128 == 0: copy-free reshape straight into the Pallas kernel.
    N = 400_000
    preds_big = jax.random.normal(k5, (N,), dtype=jnp.float32)
    targets_big = jax.random.normal(k6, (N,), dtype=jnp.float32)
    loss_big = diffpool_regression_loss(targets_big, preds_big, lp_loss, ent_loss)
    jax.block_until_ready(loss_big)
    ref_big = _reference(targets_big, preds_big, lp_loss, ent_loss)
    assert jnp.allclose(loss_big, ref_big, atol=1e-4, rtol=1e-4), (loss_big, ref_big)

    # Ragged size: exercises the minimal lane pad + in-kernel row masking path.
    M = 70_001
    preds_rag = jax.random.normal(k7, (M, 1), dtype=jnp.float32)
    targets_rag = jax.random.normal(k8, (M, 1), dtype=jnp.float32)
    loss_rag = diffpool_regression_loss(targets_rag, preds_rag, lp_loss, ent_loss)
    jax.block_until_ready(loss_rag)
    ref_rag = _reference(targets_rag, preds_rag, lp_loss, ent_loss)
    assert jnp.allclose(loss_rag, ref_rag, atol=1e-4, rtol=1e-4), (loss_rag, ref_rag)

    print("KERNEL_OK")
</pallas_src>

<mosaic_0001>
module attributes {stable_mosaic.version = 11 : i64} {
  func.func @_sse_partial_kernel(%arg0: i32, %arg1: i32, %arg2: memref<1568x128xf32, #tpu.memory_space<vmem>>, %arg3: memref<1568x128xf32, #tpu.memory_space<vmem>>, %arg4: memref<8x128xf32, #tpu.memory_space<vmem>>, %arg5: memref<8x128xf32, #tpu.memory_space<vmem>>) attributes {dimension_semantics = [#tpu.dimension_semantics<parallel>, #tpu.dimension_semantics<arbitrary>], iteration_bounds = array<i64: 1, 2>, scalar_prefetch = 0 : i64, scratch_operands = 1 : i64, tpu.core_type = #tpu.core_type<tc>, window_params = [{transform_indices = @transform_0, window_bounds = array<i64: 1568, 128>}, {transform_indices = @transform_1, window_bounds = array<i64: 1568, 128>}, {transform_indices = @transform_2, window_bounds = array<i64: 8, 128>}]} {
    %c0_i32 = arith.constant 0 : i32
    %0 = arith.cmpi eq, %arg1, %c0_i32 : i32
    %1 = arith.extui %0 : i1 to i32
    %c0_i32_0 = arith.constant 0 : i32
    %2 = arith.cmpi ne, %1, %c0_i32_0 : i32
    scf.if %2 {
      %cst_10 = arith.constant 0.000000e+00 : f32
      %25 = vector.broadcast %cst_10 : f32 to vector<8x128xf32>
      %c0_11 = arith.constant 0 : index
      %c0_12 = arith.constant 0 : index
      %26 = vector.load %arg5[%c0_11, %c0_12] : memref<8x128xf32, #tpu.memory_space<vmem>>, vector<8x128xf32>
      tpu.vector_store %arg5[%c0_11, %c0_12], %25 {strides = array<i32>} : memref<8x128xf32, #tpu.memory_space<vmem>>, vector<8x128xf32>,
    } else {
    }
    %c0 = arith.constant 0 : index
    %c0_1 = arith.constant 0 : index
    %3 = vector.load %arg2[%c0, %c0_1] : memref<1568x128xf32, #tpu.memory_space<vmem>>, vector<1568x128xf32>
    %c0_2 = arith.constant 0 : index
    %c0_3 = arith.constant 0 : index
    %4 = vector.load %arg3[%c0_2, %c0_3] : memref<1568x128xf32, #tpu.memory_space<vmem>>, vector<1568x128xf32>
    %c2_i32 = arith.constant 2 : i32
    %5 = arith.muli %arg0, %c2_i32 : i32
    %6 = arith.addi %5, %arg1 : i32
    %c1568_i32 = arith.constant 1568 : i32
    %7 = arith.muli %6, %c1568_i32 : i32
    %8 = tpu.iota {dimensions = array<i32: 0>} : vector<1568x128xi32>
    %9 = vector.broadcast %7 : i32 to vector<1568x128xi32>
    %10 = arith.addi %9, %8 : vector<1568x128xi32>
    %c3125_i32 = arith.constant 3125 : i32
    %11 = vector.broadcast %c3125_i32 : i32 to vector<1568x128xi32>
    %12 = arith.cmpi slt, %10, %11 : vector<1568x128xi32>
    %13 = arith.subf %3, %4 : vector<1568x128xf32>
    %cst = arith.constant 0.000000e+00 : f32
    %14 = vector.broadcast %cst : f32 to vector<1568x128xf32>
    %15 = arith.select %12, %13, %14 : vector<1568x128xi1>, vector<1568x128xf32>
    %c0_4 = arith.constant 0 : index
    %c0_5 = arith.constant 0 : index
    %16 = vector.load %arg5[%c0_4, %c0_5] : memref<8x128xf32, #tpu.memory_space<vmem>>, vector<8x128xf32>
    %17 = arith.mulf %15, %15 : vector<1568x128xf32>
    %18 = vector.shape_cast %17 : vector<1568x128xf32> to vector<196x8x128xf32>
    %cst_6 = arith.constant dense<0.000000e+00> : vector<8x128xf32>
    %19 = vector.multi_reduction <add>, %18, %cst_6 [0] : vector<196x8x128xf32> to vector<8x128xf32>
    %20 = arith.addf %16, %19 : vector<8x128xf32>
    %c0_7 = arith.constant 0 : index
    %c0_8 = arith.constant 0 : index
    %21 = vector.load %arg5[%c0_7, %c0_8] : memref<8x128xf32, #tpu.memory_space<vmem>>, vector<8x128xf32>
    tpu.vector_store %arg5[%c0_7, %c0_8], %20 {strides = array<i32>} : memref<8x128xf32, #tpu.memory_space<vmem>>, vector<8x128xf32>,
    %c1_i32 = arith.constant 1 : i32
    %22 = arith.cmpi eq, %arg1, %c1_i32 : i32
    %23 = arith.extui %22 : i1 to i32
    %c0_i32_9 = arith.constant 0 : i32
    %24 = arith.cmpi ne, %23, %c0_i32_9 : i32
    scf.if %24 {
      %c0_10 = arith.constant 0 : index
      %c0_11 = arith.constant 0 : index
      %25 = vector.load %arg5[%c0_10, %c0_11] : memref<8x128xf32, #tpu.memory_space<vmem>>, vector<8x128xf32>
      %c0_12 = arith.constant 0 : index
      %c0_13 = arith.constant 0 : index
      %26 = vector.load %arg4[%c0_12, %c0_13] : memref<8x128xf32, #tpu.memory_space<vmem>>, vector<8x128xf32>
      tpu.vector_store %arg4[%c0_12, %c0_13], %25 {strides = array<i32>} : memref<8x128xf32, #tpu.memory_space<vmem>>, vector<8x128xf32>,
    } else {
    }
    return
  }
  func.func @transform_0(%arg0: i32, %arg1: i32) -> (i32, i32) {
    %c2_i32 = arith.constant 2 : i32
    %0 = arith.muli %arg0, %c2_i32 : i32
    %1 = arith.addi %0, %arg1 : i32
    %c0_i32 = arith.constant 0 : i32
    %c0_i32_0 = arith.constant 0 : i32
    return %1, %c0_i32 : i32, i32
  }
  func.func @transform_1(%arg0: i32, %arg1: i32) -> (i32, i32) {
    %c2_i32 = arith.constant 2 : i32
    %0 = arith.muli %arg0, %c2_i32 : i32
    %1 = arith.addi %0, %arg1 : i32
    %c0_i32 = arith.constant 0 : i32
    %c0_i32_0 = arith.constant 0 : i32
    return %1, %c0_i32 : i32, i32
  }
  func.func @transform_2(%arg0: i32, %arg1: i32) -> (i32, i32) {
    %c0_i32 = arith.constant 0 : i32
    %c0_i32_0 = arith.constant 0 : i32
    return %arg0, %c0_i32 : i32, i32
  }
}

</mosaic_0001>

<llo_original>
// kernel: tpu_custom_call.1
$region0: #{tpu_custom_call.1}
  #allocation0 [shape = 'u32[]', space=smem, size = 0x4, offset = 0x4, fixed_abs, tag = 'smem constant byte address 0x4 - core index']
  #allocation1 [shape = 'u32[144,128]{1,0:T(1,128)}', space=vmem, size = 0x12000, scoped, tag = 'internal scratch']
  #allocation2 [shape = 'f32[8,128]{1,0:T(8,128)}', space=vmem, size = 0x1000, scoped, tag = 'scratch operand']
  %s0 = inlined_call_operand.hbm [shape: f32[3125,128], index: 0, kind: input, shape index: {}]
  %s1 = inlined_call_operand.hbm [shape: f32[3125,128], index: 1, kind: input, shape index: {}]
  %s2 = inlined_call_operand.hbm [shape: f32[8,128], index: 2, kind: output, shape index: {}]
  %s3 = sld [smem:[#allocation0]]
  $region57: #{tpu_custom_call.1} parent=0
    _
  %s5 = ssub.s32 1, %s3
  %s6 = scalar_select 0, %s5, %s3
  $region1: #{tpu_custom_call.1} parent=0
    #allocation3 [shape = 'u8[1605632]{0}', space=vmem, size = 0x188000, scoped, tag = 'input window, operand 0']
    #allocation4 [shape = 's32[2]{0}', space=sflag, size = 0x8, scoped, tag = 'scoped memory for tpu_custom_call.1']
    #allocation5 [shape = 's32[2]{0}', space=sflag, size = 0x8, scoped, tag = 'scoped memory for tpu_custom_call.1']
    #allocation6 [shape = 'u8[1605632]{0}', space=vmem, size = 0x188000, scoped, tag = 'input window, operand 1']
    #allocation7 [shape = 's32[2]{0}', space=sflag, size = 0x8, scoped, tag = 'scoped memory for tpu_custom_call.1']
    #allocation8 [shape = 'u8[4096]{0}', space=vmem, size = 0x1000, scoped, tag = 'output window, operand 0, single buffered']
    %7 = vsyncpa [#allocation4], 0
    %s8 = scalar_lea.sflag [#allocation4], 1
    %9 = vsyncpa %s8, 0
    %10 = vsyncpa [#allocation7], 0
    %s11 = scalar_lea.sflag [#allocation7], 1
    %12 = vsyncpa %s11, 0
    %13 = vsyncpa [#allocation5], 0
    loop: start=0, step=1, limit=4
    $region2: #{tpu_custom_call.1} parent=1 // loop_pre_header
      _
    $region3: #{tpu_custom_call.1} parent=1 // loop_header
      %s15 = sphi 0, %s19
      %p16 = scmp.ge.s32.totalorder %s15, 4
      %s22 = sphi 0, %s34
      %s23 = sphi 0, %s30
      %s24 = sphi 0, %s22
      %s25 = sphi 0, %s23
      %s26 = sphi 0, %s24
      %s27 = sphi 0, %s25
      %s41 = sphi 0, %s43
      %s44 = sphi 0, %s41
      %s45 = sphi 0, %s44
      %s61 = sphi 0, %s45
      %s71 = sphi 0, %s73
      %s74 = sphi 0, %s71
      %s75 = sphi 0, %s74
      %s91 = sphi 0, %s75
      %s97 = sphi 0, %s99
      %s100 = sphi 0, %s97
      %s101 = sphi 0, %s100
      %s117 = sphi 0, %s101
    $region4: #{tpu_custom_call.1} parent=1 // loop_header_branch
      %18 = sbr.rel (%p16) target = $region8
    $region5: #{tpu_custom_call.1} parent=1 // loop_body
      %s20 = ssub.s32 %s15, 1
      %s21 = ssub.s32 %s15, 2
      %s28 = sadd.s32 1, %s23
      %p29 = scmp.ge.s32.totalorder %s28, 2
      %s30 = scalar_select %p29, 0, %s28
      %s31 = sadd.s32 1, %s22
      %s32 = scalar_select %p29, %s31, %s22
      %p33 = scmp.ge.s32.totalorder %s32, 1
      %s34 = scalar_select %p33, 0, %s32
      %s35 = smul.u32 %s22, 2
      %s36 = sadd.s32 %s35, %s23
      %s37 = smul.u32 %s34, 2
      %s38 = sadd.s32 %s37, %s30
      %s39 = ssub.s32 %s36, %s38
      %p40 = scmp.eq.s32.totalorder %s39, 0
      %s42 = sadd.s32 %s41, 1
      %s43 = scalar_select %p40, %s41, %s42
      %p46 = pneg %p40
      %p47 = scmp.eq.s32.totalorder %s15, 1
      %p48 = por %p46, %p47
      %p49 = scmp.ne.s32.totalorder %s41, %s44
      %p50 = scmp.eq.s32.totalorder %s15, 0
      %p51 = por %p49, %p50
      %p52 = scmp.ne.s32.totalorder %s41, %s44
      %p53 = scmp.eq.s32.totalorder %s20, 1
      %p54 = por %p52, %p53
      %p55 = scmp.ne.s32.totalorder %s44, %s45
      %p56 = scmp.eq.s32.totalorder %s20, 0
      %p57 = por %p55, %p56
      %p58 = scmp.ne.s32.totalorder %s44, %s45
      %p59 = scmp.eq.s32.totalorder %s21, 1
      %p60 = por %p58, %p59
      %p62 = scmp.ne.s32.totalorder %s45, %s61
      %p63 = scmp.eq.s32.totalorder %s21, 0
      %p64 = por %p62, %p63
      %s65 = smul.u32 %s22, 2
      %s66 = sadd.s32 %s65, %s23
      %s67 = smul.u32 %s34, 2
      %s68 = sadd.s32 %s67, %s30
      %s69 = ssub.s32 %s66, %s68
      %p70 = scmp.eq.s32.totalorder %s69, 0
      %s72 = sadd.s32 %s71, 1
      %s73 = scalar_select %p70, %s71, %s72
      %p76 = pneg %p70
      %p77 = scmp.eq.s32.totalorder %s15, 1
      %p78 = por %p76, %p77
      %p79 = scmp.ne.s32.totalorder %s71, %s74
      %p80 = scmp.eq.s32.totalorder %s15, 0
      %p81 = por %p79, %p80
      %p82 = scmp.ne.s32.totalorder %s71, %s74
      %p83 = scmp.eq.s32.totalorder %s20, 1
      %p84 = por %p82, %p83
      %p85 = scmp.ne.s32.totalorder %s74, %s75
      %p86 = scmp.eq.s32.totalorder %s20, 0
      %p87 = por %p85, %p86
      %p88 = scmp.ne.s32.totalorder %s74, %s75
      %p89 = scmp.eq.s32.totalorder %s21, 1
      %p90 = por %p88, %p89
      %p92 = scmp.ne.s32.totalorder %s75, %s91
      %p93 = scmp.eq.s32.totalorder %s21, 0
      %p94 = por %p92, %p93
      %s95 = ssub.s32 %s22, %s34
      %p96 = scmp.eq.s32.totalorder %s95, 0
      %s98 = sadd.s32 %s97, 1
      %s99 = scalar_select %p96, %s97, %s98
      %p102 = pneg %p96
      %p103 = scmp.eq.s32.totalorder %s15, 1
      %p104 = por %p102, %p103
      %p105 = scmp.ne.s32.totalorder %s97, %s100
      %p106 = scmp.eq.s32.totalorder %s15, 0
      %p107 = por %p105, %p106
      %p108 = scmp.ne.s32.totalorder %s97, %s100
      %p109 = scmp.eq.s32.totalorder %s20, 1
      %p110 = por %p108, %p109
      %p111 = scmp.ne.s32.totalorder %s100, %s101
      %p112 = scmp.eq.s32.totalorder %s20, 0
      %p113 = por %p111, %p112
      %p114 = scmp.ne.s32.totalorder %s100, %s101
      %p115 = scmp.eq.s32.totalorder %s21, 1
      %p116 = por %p114, %p115
      %p118 = scmp.ne.s32.totalorder %s101, %s117
      %p119 = scmp.eq.s32.totalorder %s21, 0
      %p120 = por %p118, %p119
      %p121 = scmp.le.s32.totalorder 1, %s15
      %p122 = scmp.lt.s32.totalorder %s15, 3
      %p123 = pnand %p121, %p122
      %p124 = pneg %p123
      // Predicated region
      $region9: #{tpu_custom_call.1} parent=5 // pred_check
        _
      $region10: #{tpu_custom_call.1} parent=5 // pred_check_branch
        %126 = sbr.rel (%p123) target = $region12
      $region11: #{tpu_custom_call.1} parent=5 // pred_region
        %s127 = ssub.s32 %s15, 1
      $region12: #{tpu_custom_call.1} parent=5 // pred_fallthru
        _
      %p128 = scmp.lt.s32.totalorder %s15, 2
      // Predicated region
      $region13: #{tpu_custom_call.1} parent=5 // pred_check
        %p129 = pneg %p128
      $region14: #{tpu_custom_call.1} parent=5 // pred_check_branch
        %131 = sbr.rel (%p129) target = $region16
      $region15: #{tpu_custom_call.1} parent=5 // pred_region
        // Predicated region
        $region17: #{tpu_custom_call.1} parent=15 // pred_check
          %p132 = pneg %p51
        $region18: #{tpu_custom_call.1} parent=15 // pred_check_branch
          %134 = sbr.rel (%p132) target = $region20
        $region19: #{tpu_custom_call.1} parent=15 // pred_region
          %s135 = sand.u32 %s41, 1
          %s136 = scalar_lea.sflag [#allocation4], %s135
          %s137 = sand.u32 %s41, 1
          %s138 = smul.addr %s137, 1568
          %s139 = scalar_lea.vmem [#allocation3], %s138
          %s140 = smul.u32 %s22, 2
          %s141 = sadd.s32 %s140, %s23
          %s142 = smul.u32 196, %s141
          %s143 = ssub.s32 391, %s142
          %p144 = scmp.lt.s32.totalorder %s143, 196
          %s145 = scalar_select %p144, %s143, 196
          %s146 = smul.u32 128, %s145
          %s148 = ssub.s32 25088, %s146
          %149 = vsyncadd %s136, %s148
          %p150 = scmp.ne.s32.totalorder 0, %s146
          %s151 = smul.addr %s142, 128
          %s152 = scalar_lea.hbm %s0, %s151
          %s153 = smul.u32 8, %s145
          %s154 = sshll.u32 %s139, 4
          %s155 = int_to_ptr.vmem [resolvable:$true] %s154
          %s156 = sshll.u32 %s153, 4
          %160 = dma.hbm_to_vmem [thread:$0]  (%p150), %s152, %s156, %s155, %s136, 128, 128, 8
        $region20: #{tpu_custom_call.1} parent=15 // pred_fallthru
          _
        // Predicated region
        $region21: #{tpu_custom_call.1} parent=15 // pred_check
          %p161 = pneg %p81
        $region22: #{tpu_custom_call.1} parent=15 // pred_check_branch
          %163 = sbr.rel (%p161) target = $region24
        $region23: #{tpu_custom_call.1} parent=15 // pred_region
          %s164 = sand.u32 %s71, 1
          %s165 = scalar_lea.sflag [#allocation7], %s164
          %s166 = sand.u32 %s71, 1
          %s167 = smul.addr %s166, 1568
          %s168 = scalar_lea.vmem [#allocation6], %s167
          %s169 = smul.u32 %s22, 2
          %s170 = sadd.s32 %s169, %s23
          %s171 = smul.u32 196, %s170
          %s172 = ssub.s32 391, %s171
          %p173 = scmp.lt.s32.totalorder %s172, 196
          %s174 = scalar_select %p173, %s172, 196
          %s175 = smul.u32 128, %s174
          %s177 = ssub.s32 25088, %s175
          %178 = vsyncadd %s165, %s177
          %p179 = scmp.ne.s32.totalorder 0, %s175
          %s180 = smul.addr %s171, 128
          %s181 = scalar_lea.hbm %s1, %s180
          %s182 = smul.u32 8, %s174
          %s183 = sshll.u32 %s168, 4
          %s184 = int_to_ptr.vmem [resolvable:$true] %s183
          %s185 = sshll.u32 %s182, 4
          %189 = dma.hbm_to_vmem [thread:$0]  (%p179), %s181, %s185, %s184, %s165, 128, 128, 8
        $region24: #{tpu_custom_call.1} parent=15 // pred_fallthru
          _
      $region16: #{tpu_custom_call.1} parent=5 // pred_fallthru
        _
      %p190 = scmp.le.s32.totalorder 1, %s15
      %p191 = scmp.lt.s32.totalorder %s15, 3
      %p192 = pnand %p190, %p191
      %p193 = pneg %p192
      // Predicated region
      $region25: #{tpu_custom_call.1} parent=5 // pred_check
        _
      $region26: #{tpu_custom_call.1} parent=5 // pred_check_branch
        %195 = sbr.rel (%p192) target = $region28
      $region27: #{tpu_custom_call.1} parent=5 // pred_region
        %s196 = ssub.s32 %s15, 1
        %s197 = sand.u32 %s44, 1
        %s198 = scalar_lea.sflag [#allocation4], %s197
        %s199 = sand.u32 %s44, 1
        %s200 = smul.addr %s199, 1568
        %s201 = scalar_lea.vmem [#allocation3], %s200
        // Predicated region
        $region29: #{tpu_custom_call.1} parent=27 // pred_check
          %p202 = pneg %p57
        $region30: #{tpu_custom_call.1} parent=27 // pred_check_branch
          %204 = sbr.rel (%p202) target = $region32
        $region31: #{tpu_custom_call.1} parent=27 // pred_region
          %205 = dma.done %s198, 25088
        $region32: #{tpu_custom_call.1} parent=27 // pred_fallthru
          _
        %s206 = sand.u32 %s74, 1
        %s207 = scalar_lea.sflag [#allocation7], %s206
        %s208 = sand.u32 %s74, 1
        %s209 = smul.addr %s208, 1568
        %s210 = scalar_lea.vmem [#allocation6], %s209
        // Predicated region
        $region33: #{tpu_custom_call.1} parent=27 // pred_check
          %p211 = pneg %p87
        $region34: #{tpu_custom_call.1} parent=27 // pred_check_branch
          %213 = sbr.rel (%p211) target = $region36
        $region35: #{tpu_custom_call.1} parent=27 // pred_region
          %214 = dma.done %s207, 25088
        $region36: #{tpu_custom_call.1} parent=27 // pred_fallthru
          _
        %s215 = sand.u32 %s44, 1
        %s216 = scalar_lea.sflag [#allocation4], %s215
        %s217 = sand.u32 %s44, 1
        %s218 = smul.addr %s217, 1568
        %s219 = scalar_lea.vmem [#allocation3], %s218
        %p220 = pneg %p57
        %p221 = pneg %p54
        %s222 = sand.u32 %s74, 1
        %s223 = scalar_lea.sflag [#allocation7], %s222
        %s224 = sand.u32 %s74, 1
        %s225 = smul.addr %s224, 1568
        %s226 = scalar_lea.vmem [#allocation6], %s225
        %p227 = pneg %p87
        %p228 = pneg %p84
        %p229 = pneg %p113
        %p230 = pneg %p110
        %s231 = smul.u32 %s24, 2
        %s232 = sadd.s32 %s231, %s25
        %s233 = smul.u32 196, %s232
        %s234 = ssub.s32 391, %s233
        %p235 = scmp.lt.s32.totalorder %s234, 196
        %s236 = scalar_select %p235, %s234, 196
        %s237 = smul.u32 128, %s236
        %s238 = smul.u32 %s24, 2
        %s239 = sadd.s32 %s238, %s25
        %s240 = smul.u32 196, %s239
        %s241 = ssub.s32 391, %s240
        %p242 = scmp.lt.s32.totalorder %s241, 196
        %s243 = scalar_select %p242, %s241, 196
        %s244 = smul.u32 128, %s243
        %p245 = scmp.eq.s32.totalorder %s25, 0
        // Predicated region
        $region37: #{tpu_custom_call.1} parent=27 // pred_check
          %p246 = pneg %p245
        $region38: #{tpu_custom_call.1} parent=27 // pred_check_branch
          %248 = sbr.rel (%p246) target = $region40
        $region39: #{tpu_custom_call.1} parent=27 // pred_region
          %249 = vst [vmem:[#allocation2] sm:$0xff] 0.0
        $region40: #{tpu_custom_call.1} parent=27 // pred_fallthru
          _
        %v250 = vld [vmem:[%s201] sm:$0xff]
        %v251 = vld [vmem:[%s201 + $0x8] sm:$0xff]
        %v252 = vld [vmem:[%s201 + $0x10] sm:$0xff]
        %v253 = vld [vmem:[%s201 + $0x18] sm:$0xff]
        %v254 = vld [vmem:[%s201 + $0x20] sm:$0xff]
        %v255 = vld [vmem:[%s201 + $0x28] sm:$0xff]
        %v256 = vld [vmem:[%s201 + $0x30] sm:$0xff]
        %v257 = vld [vmem:[%s201 + $0x38] sm:$0xff]
        %v258 = vld [vmem:[%s201 + $0x40] sm:$0xff]
        %v259 = vld [vmem:[%s201 + $0x48] sm:$0xff]
        %v260 = vld [vmem:[%s201 + $0x50] sm:$0xff]
        %v261 = vld [vmem:[%s201 + $0x58] sm:$0xff]
        %v262 = vld [vmem:[%s201 + $0x60] sm:$0xff]
        %v263 = vld [vmem:[%s201 + $0x68] sm:$0xff]
        %v264 = vld [vmem:[%s201 + $0x70] sm:$0xff]
        %v265 = vld [vmem:[%s201 + $0x78] sm:$0xff]
        %v266 = vld [vmem:[%s201 + $0x80] sm:$0xff]
        %v267 = vld [vmem:[%s201 + $0x88] sm:$0xff]
        %v268 = vld [vmem:[%s201 + $0x90] sm:$0xff]
        %v269 = vld [vmem:[%s201 + $0x98] sm:$0xff]
        %v270 = vld [vmem:[%s201 + $0xa0] sm:$0xff]
        %v271 = vld [vmem:[%s201 + $0xa8] sm:$0xff]
        %v272 = vld [vmem:[%s201 + $0xb0] sm:$0xff]
        %v273 = vld [vmem:[%s201 + $0xb8] sm:$0xff]
        %v274 = vld [vmem:[%s201 + $0xc0] sm:$0xff]
        %v275 = vld [vmem:[%s201 + $0xc8] sm:$0xff]
        %v276 = vld [vmem:[%s201 + $0xd0] sm:$0xff]
        %v277 = vld [vmem:[%s201 + $0xd8] sm:$0xff]
        %v278 = vld [vmem:[%s201 + $0xe0] sm:$0xff]
        %v279 = vld [vmem:[%s201 + $0xe8] sm:$0xff]
        %v280 = vld [vmem:[%s201 + $0xf0] sm:$0xff]
        %v281 = vld [vmem:[%s201 + $0xf8] sm:$0xff]
        %v282 = vld [vmem:[%s201 + $0x100] sm:$0xff]
        %v283 = vld [vmem:[%s201 + $0x108] sm:$0xff]
        %v284 = vld [vmem:[%s201 + $0x110] sm:$0xff]
        %v285 = vld [vmem:[%s201 + $0x118] sm:$0xff]
        %v286 = vld [vmem:[%s201 + $0x120] sm:$0xff]
        %v287 = vld [vmem:[%s201 + $0x128] sm:$0xff]
        %v288 = vld [vmem:[%s201 + $0x130] sm:$0xff]
        %v289 = vld [vmem:[%s201 + $0x138] sm:$0xff]
        %v290 = vld [vmem:[%s201 + $0x140] sm:$0xff]
        %v291 = vld [vmem:[%s201 + $0x148] sm:$0xff]
        %v292 = vld [vmem:[%s201 + $0x150] sm:$0xff]
        %v293 = vld [vmem:[%s201 + $0x158] sm:$0xff]
        %v294 = vld [vmem:[%s201 + $0x160] sm:$0xff]
        %v295 = vld [vmem:[%s201 + $0x168] sm:$0xff]
        %v296 = vld [vmem:[%s201 + $0x170] sm:$0xff]
        %v297 = vld [vmem:[%s201 + $0x178] sm:$0xff]
        %v298 = vld [vmem:[%s201 + $0x180] sm:$0xff]
        %v299 = vld [vmem:[%s201 + $0x188] sm:$0xff]
        %v300 = vld [vmem:[%s201 + $0x190] sm:$0xff]
        %v301 = vld [vmem:[%s201 + $0x198] sm:$0xff]
        %v302 = vld [vmem:[%s201 + $0x1a0] sm:$0xff]
        %v303 = vld [vmem:[%s201 + $0x1a8] sm:$0xff]
        %v304 = vld [vmem:[%s201 + $0x1b0] sm:$0xff]
        %v305 = vld [vmem:[%s201 + $0x1b8] sm:$0xff]
        %v306 = vld [vmem:[%s201 + $0x1c0] sm:$0xff]
        %v307 = vld [vmem:[%s201 + $0x1c8] sm:$0xff]
        %v308 = vld [vmem:[%s201 + $0x1d0] sm:$0xff]
        %v309 = vld [vmem:[%s201 + $0x1d8] sm:$0xff]
        %v310 = vld [vmem:[%s201 + $0x1e0] sm:$0xff]
        %v311 = vld [vmem:[%s201 + $0x1e8] sm:$0xff]
        %v312 = vld [vmem:[%s201 + $0x1f0] sm:$0xff]
        %v313 = vld [vmem:[%s201 + $0x1f8] sm:$0xff]
        %v314 = vld [vmem:[%s201 + $0x200] sm:$0xff]
        %v315 = vld [vmem:[%s201 + $0x208] sm:$0xff]
        %v316 = vld [vmem:[%s201 + $0x210] sm:$0xff]
        %v317 = vld [vmem:[%s201 + $0x218] sm:$0xff]
        %v318 = vld [vmem:[%s201 + $0x220] sm:$0xff]
        %v319 = vld [vmem:[%s201 + $0x228] sm:$0xff]
        %v320 = vld [vmem:[%s201 + $0x230] sm:$0xff]
        %v321 = vld [vmem:[%s201 + $0x238] sm:$0xff]
        %v322 = vld [vmem:[%s201 + $0x240] sm:$0xff]
        %v323 = vld [vmem:[%s201 + $0x248] sm:$0xff]
        %v324 = vld [vmem:[%s201 + $0x250] sm:$0xff]
        %v325 = vld [vmem:[%s201 + $0x258] sm:$0xff]
        %v326 = vld [vmem:[%s201 + $0x260] sm:$0xff]
        %v327 = vld [vmem:[%s201 + $0x268] sm:$0xff]
        %v328 = vld [vmem:[%s201 + $0x270] sm:$0xff]
        %v329 = vld [vmem:[%s201 + $0x278] sm:$0xff]
        %v330 = vld [vmem:[%s201 + $0x280] sm:$0xff]
        %v331 = vld [vmem:[%s201 + $0x288] sm:$0xff]
        %v332 = vld [vmem:[%s201 + $0x290] sm:$0xff]
        %v333 = vld [vmem:[%s201 + $0x298] sm:$0xff]
        %v334 = vld [vmem:[%s201 + $0x2a0] sm:$0xff]
        %v335 = vld [vmem:[%s201 + $0x2a8] sm:$0xff]
        %v336 = vld [vmem:[%s201 + $0x2b0] sm:$0xff]
        %v337 = vld [vmem:[%s201 + $0x2b8] sm:$0xff]
        %v338 = vld [vmem:[%s201 + $0x2c0] sm:$0xff]
        %v339 = vld [vmem:[%s201 + $0x2c8] sm:$0xff]
        %v340 = vld [vmem:[%s201 + $0x2d0] sm:$0xff]
        %v341 = vld [vmem:[%s201 + $0x2d8] sm:$0xff]
        %v342 = vld [vmem:[%s201 + $0x2e0] sm:$0xff]
        %v343 = vld [vmem:[%s201 + $0x2e8] sm:$0xff]
        %v344 = vld [vmem:[%s201 + $0x2f0] sm:$0xff]
        %v345 = vld [vmem:[%s201 + $0x2f8] sm:$0xff]
        %v346 = vld [vmem:[%s201 + $0x300] sm:$0xff]
        %v347 = vld [vmem:[%s201 + $0x308] sm:$0xff]
        %v348 = vld [vmem:[%s201 + $0x310] sm:$0xff]
        %v349 = vld [vmem:[%s201 + $0x318] sm:$0xff]
        %v350 = vld [vmem:[%s201 + $0x320] sm:$0xff]
        %v351 = vld [vmem:[%s201 + $0x328] sm:$0xff]
        %v352 = vld [vmem:[%s201 + $0x330] sm:$0xff]
        %v353 = vld [vmem:[%s201 + $0x338] sm:$0xff]
        %v354 = vld [vmem:[%s201 + $0x340] sm:$0xff]
        %v355 = vld [vmem:[%s201 + $0x348] sm:$0xff]
        %v356 = vld [vmem:[%s201 + $0x350] sm:$0xff]
        %v357 = vld [vmem:[%s201 + $0x358] sm:$0xff]
        %v358 = vld [vmem:[%s201 + $0x360] sm:$0xff]
        %v359 = vld [vmem:[%s201 + $0x368] sm:$0xff]
        %v360 = vld [vmem:[%s201 + $0x370] sm:$0xff]
        %v361 = vld [vmem:[%s201 + $0x378] sm:$0xff]
        %v362 = vld [vmem:[%s201 + $0x380] sm:$0xff]
        %v363 = vld [vmem:[%s201 + $0x388] sm:$0xff]
        %v364 = vld [vmem:[%s201 + $0x390] sm:$0xff]
        %v365 = vld [vmem:[%s201 + $0x398] sm:$0xff]
        %v366 = vld [vmem:[%s201 + $0x3a0] sm:$0xff]
        %v367 = vld [vmem:[%s201 + $0x3a8] sm:$0xff]
        %v368 = vld [vmem:[%s201 + $0x3b0] sm:$0xff]
        %v369 = vld [vmem:[%s201 + $0x3b8] sm:$0xff]
        %v370 = vld [vmem:[%s201 + $0x3c0] sm:$0xff]
        %v371 = vld [vmem:[%s201 + $0x3c8] sm:$0xff]
        %v372 = vld [vmem:[%s201 + $0x3d0] sm:$0xff]
        %v373 = vld [vmem:[%s201 + $0x3d8] sm:$0xff]
        %v374 = vld [vmem:[%s201 + $0x3e0] sm:$0xff]
        %v375 = vld [vmem:[%s201 + $0x3e8] sm:$0xff]
        %v376 = vld [vmem:[%s201 + $0x3f0] sm:$0xff]
        %v377 = vld [vmem:[%s201 + $0x3f8] sm:$0xff]
        %v378 = vld [vmem:[%s201 + $0x400] sm:$0xff]
        %v379 = vld [vmem:[%s201 + $0x408] sm:$0xff]
        %v380 = vld [vmem:[%s201 + $0x410] sm:$0xff]
        %v381 = vld [vmem:[%s201 + $0x418] sm:$0xff]
        %v382 = vld [vmem:[%s201 + $0x420] sm:$0xff]
        %v383 = vld [vmem:[%s201 + $0x428] sm:$0xff]
        %v384 = vld [vmem:[%s201 + $0x430] sm:$0xff]
        %v385 = vld [vmem:[%s201 + $0x438] sm:$0xff]
        %v386 = vld [vmem:[%s201 + $0x440] sm:$0xff]
        %v387 = vld [vmem:[%s201 + $0x448] sm:$0xff]
        %v388 = vld [vmem:[%s201 + $0x450] sm:$0xff]
        %v389 = vld [vmem:[%s201 + $0x458] sm:$0xff]
        %v390 = vld [vmem:[%s201 + $0x460] sm:$0xff]
        %v391 = vld [vmem:[%s201 + $0x468] sm:$0xff]
        %v392 = vld [vmem:[%s201 + $0x470] sm:$0xff]
        %v393 = vld [vmem:[%s201 + $0x478] sm:$0xff]
        %v394 = vld [vmem:[%s201 + $0x480] sm:$0xff]
        %v395 = vld [vmem:[%s201 + $0x488] sm:$0xff]
        %v396 = vld [vmem:[%s201 + $0x490] sm:$0xff]
        %v397 = vld [vmem:[%s201 + $0x498] sm:$0xff]
        %v398 = vld [vmem:[%s201 + $0x4a0] sm:$0xff]
        %v399 = vld [vmem:[%s201 + $0x4a8] sm:$0xff]
        %v400 = vld [vmem:[%s201 + $0x4b0] sm:$0xff]
        %v401 = vld [vmem:[%s201 + $0x4b8] sm:$0xff]
        %v402 = vld [vmem:[%s201 + $0x4c0] sm:$0xff]
        %v403 = vld [vmem:[%s201 + $0x4c8] sm:$0xff]
        %v404 = vld [vmem:[%s201 + $0x4d0] sm:$0xff]
        %v405 = vld [vmem:[%s201 + $0x4d8] sm:$0xff]
        %v406 = vld [vmem:[%s201 + $0x4e0] sm:$0xff]
        %v407 = vld [vmem:[%s201 + $0x4e8] sm:$0xff]
        %v408 = vld [vmem:[%s201 + $0x4f0] sm:$0xff]
        %v409 = vld [vmem:[%s201 + $0x4f8] sm:$0xff]
        %v410 = vld [vmem:[%s201 + $0x500] sm:$0xff]
        %v411 = vld [vmem:[%s201 + $0x508] sm:$0xff]
        %v412 = vld [vmem:[%s201 + $0x510] sm:$0xff]
        %v413 = vld [vmem:[%s201 + $0x518] sm:$0xff]
        %v414 = vld [vmem:[%s201 + $0x520] sm:$0xff]
        %v415 = vld [vmem:[%s201 + $0x528] sm:$0xff]
        %v416 = vld [vmem:[%s201 + $0x530] sm:$0xff]
        %v417 = vld [vmem:[%s201 + $0x538] sm:$0xff]
        %v418 = vld [vmem:[%s201 + $0x540] sm:$0xff]
        %v419 = vld [vmem:[%s201 + $0x548] sm:$0xff]
        %v420 = vld [vmem:[%s201 + $0x550] sm:$0xff]
        %v421 = vld [vmem:[%s201 + $0x558] sm:$0xff]
        %v422 = vld [vmem:[%s201 + $0x560] sm:$0xff]
        %v423 = vld [vmem:[%s201 + $0x568] sm:$0xff]
        %v424 = vld [vmem:[%s201 + $0x570] sm:$0xff]
        %v425 = vld [vmem:[%s201 + $0x578] sm:$0xff]
        %v426 = vld [vmem:[%s201 + $0x580] sm:$0xff]
        %v427 = vld [vmem:[%s201 + $0x588] sm:$0xff]
        %v428 = vld [vmem:[%s201 + $0x590] sm:$0xff]
        %v429 = vld [vmem:[%s201 + $0x598] sm:$0xff]
        %v430 = vld [vmem:[%s201 + $0x5a0] sm:$0xff]
        %v431 = vld [vmem:[%s201 + $0x5a8] sm:$0xff]
        %v432 = vld [vmem:[%s201 + $0x5b0] sm:$0xff]
        %v433 = vld [vmem:[%s201 + $0x5b8] sm:$0xff]
        %v434 = vld [vmem:[%s201 + $0x5c0] sm:$0xff]
        %v435 = vld [vmem:[%s201 + $0x5c8] sm:$0xff]
        %v436 = vld [vmem:[%s201 + $0x5d0] sm:$0xff]
        %v437 = vld [vmem:[%s201 + $0x5d8] sm:$0xff]
        %v438 = vld [vmem:[%s201 + $0x5e0] sm:$0xff]
        %v439 = vld [vmem:[%s201 + $0x5e8] sm:$0xff]
        %v440 = vld [vmem:[%s201 + $0x5f0] sm:$0xff]
        %v441 = vld [vmem:[%s201 + $0x5f8] sm:$0xff]
        %v442 = vld [vmem:[%s201 + $0x600] sm:$0xff]
        %v443 = vld [vmem:[%s201 + $0x608] sm:$0xff]
        %v444 = vld [vmem:[%s201 + $0x610] sm:$0xff]
        %v445 = vld [vmem:[%s201 + $0x618] sm:$0xff]
        %v446 = vld [vmem:[%s210] sm:$0xff]
        %v447 = vld [vmem:[%s210 + $0x8] sm:$0xff]
        %v448 = vld [vmem:[%s210 + $0x10] sm:$0xff]
        %v449 = vld [vmem:[%s210 + $0x18] sm:$0xff]
        %v450 = vld [vmem:[%s210 + $0x20] sm:$0xff]
        %v451 = vld [vmem:[%s210 + $0x28] sm:$0xff]
        %v452 = vld [vmem:[%s210 + $0x30] sm:$0xff]
        %v453 = vld [vmem:[%s210 + $0x38] sm:$0xff]
        %v454 = vld [vmem:[%s210 + $0x40] sm:$0xff]
        %v455 = vld [vmem:[%s210 + $0x48] sm:$0xff]
        %v456 = vld [vmem:[%s210 + $0x50] sm:$0xff]
        %v457 = vld [vmem:[%s210 + $0x58] sm:$0xff]
        %v458 = vld [vmem:[%s210 + $0x60] sm:$0xff]
        %v459 = vld [vmem:[%s210 + $0x68] sm:$0xff]
        %v460 = vld [vmem:[%s210 + $0x70] sm:$0xff]
        %v461 = vld [vmem:[%s210 + $0x78] sm:$0xff]
        %v462 = vld [vmem:[%s210 + $0x80] sm:$0xff]
        %v463 = vld [vmem:[%s210 + $0x88] sm:$0xff]
        %v464 = vld [vmem:[%s210 + $0x90] sm:$0xff]
        %v465 = vld [vmem:[%s210 + $0x98] sm:$0xff]
        %v466 = vld [vmem:[%s210 + $0xa0] sm:$0xff]
        %v467 = vld [vmem:[%s210 + $0xa8] sm:$0xff]
        %v468 = vld [vmem:[%s210 + $0xb0] sm:$0xff]
        %v469 = vld [vmem:[%s210 + $0xb8] sm:$0xff]
        %v470 = vld [vmem:[%s210 + $0xc0] sm:$0xff]
        %v471 = vld [vmem:[%s210 + $0xc8] sm:$0xff]
        %v472 = vld [vmem:[%s210 + $0xd0] sm:$0xff]
        %v473 = vld [vmem:[%s210 + $0xd8] sm:$0xff]
        %v474 = vld [vmem:[%s210 + $0xe0] sm:$0xff]
        %v475 = vld [vmem:[%s210 + $0xe8] sm:$0xff]
        %v476 = vld [vmem:[%s210 + $0xf0] sm:$0xff]
        %v477 = vld [vmem:[%s210 + $0xf8] sm:$0xff]
        %v478 = vld [vmem:[%s210 + $0x100] sm:$0xff]
        %v479 = vld [vmem:[%s210 + $0x108] sm:$0xff]
        %v480 = vld [vmem:[%s210 + $0x110] sm:$0xff]
        %v481 = vld [vmem:[%s210 + $0x118] sm:$0xff]
        %v482 = vld [vmem:[%s210 + $0x120] sm:$0xff]
        %v483 = vld [vmem:[%s210 + $0x128] sm:$0xff]
        %v484 = vld [vmem:[%s210 + $0x130] sm:$0xff]
        %v485 = vld [vmem:[%s210 + $0x138] sm:$0xff]
        %v486 = vld [vmem:[%s210 + $0x140] sm:$0xff]
        %v487 = vld [vmem:[%s210 + $0x148] sm:$0xff]
        %v488 = vld [vmem:[%s210 + $0x150] sm:$0xff]
        %v489 = vld [vmem:[%s210 + $0x158] sm:$0xff]
        %v490 = vld [vmem:[%s210 + $0x160] sm:$0xff]
        %v491 = vld [vmem:[%s210 + $0x168] sm:$0xff]
        %v492 = vld [vmem:[%s210 + $0x170] sm:$0xff]
        %v493 = vld [vmem:[%s210 + $0x178] sm:$0xff]
        %v494 = vld [vmem:[%s210 + $0x180] sm:$0xff]
        %v495 = vld [vmem:[%s210 + $0x188] sm:$0xff]
        %v496 = vld [vmem:[%s210 + $0x190] sm:$0xff]
        %v497 = vld [vmem:[%s210 + $0x198] sm:$0xff]
        %v498 = vld [vmem:[%s210 + $0x1a0] sm:$0xff]
        %v499 = vld [vmem:[%s210 + $0x1a8] sm:$0xff]
        %v500 = vld [vmem:[%s210 + $0x1b0] sm:$0xff]
        %v501 = vld [vmem:[%s210 + $0x1b8] sm:$0xff]
        %v502 = vld [vmem:[%s210 + $0x1c0] sm:$0xff]
        %v503 = vld [vmem:[%s210 + $0x1c8] sm:$0xff]
        %v504 = vld [vmem:[%s210 + $0x1d0] sm:$0xff]
        %v505 = vld [vmem:[%s210 + $0x1d8] sm:$0xff]
        %v506 = vld [vmem:[%s210 + $0x1e0] sm:$0xff]
        %v507 = vld [vmem:[%s210 + $0x1e8] sm:$0xff]
        %v508 = vld [vmem:[%s210 + $0x1f0] sm:$0xff]
        %v509 = vld [vmem:[%s210 + $0x1f8] sm:$0xff]
        %v510 = vld [vmem:[%s210 + $0x200] sm:$0xff]
        %v511 = vld [vmem:[%s210 + $0x208] sm:$0xff]
        %v512 = vld [vmem:[%s210 + $0x210] sm:$0xff]
        %v513 = vld [vmem:[%s210 + $0x218] sm:$0xff]
        %v514 = vld [vmem:[%s210 + $0x220] sm:$0xff]
        %v515 = vld [vmem:[%s210 + $0x228] sm:$0xff]
        %v516 = vld [vmem:[%s210 + $0x230] sm:$0xff]
        %v517 = vld [vmem:[%s210 + $0x238] sm:$0xff]
        %v518 = vld [vmem:[%s210 + $0x240] sm:$0xff]
        %v519 = vld [vmem:[%s210 + $0x248] sm:$0xff]
        %v520 = vld [vmem:[%s210 + $0x250] sm:$0xff]
        %v521 = vld [vmem:[%s210 + $0x258] sm:$0xff]
        %v522 = vld [vmem:[%s210 + $0x260] sm:$0xff]
        %v523 = vld [vmem:[%s210 + $0x268] sm:$0xff]
        %v524 = vld [vmem:[%s210 + $0x270] sm:$0xff]
        %v525 = vld [vmem:[%s210 + $0x278] sm:$0xff]
        %v526 = vld [vmem:[%s210 + $0x280] sm:$0xff]
        %v527 = vld [vmem:[%s210 + $0x288] sm:$0xff]
        %v528 = vld [vmem:[%s210 + $0x290] sm:$0xff]
        %v529 = vld [vmem:[%s210 + $0x298] sm:$0xff]
        %v530 = vld [vmem:[%s210 + $0x2a0] sm:$0xff]
        %v531 = vld [vmem:[%s210 + $0x2a8] sm:$0xff]
        %v532 = vld [vmem:[%s210 + $0x2b0] sm:$0xff]
        %v533 = vld [vmem:[%s210 + $0x2b8] sm:$0xff]
        %v534 = vld [vmem:[%s210 + $0x2c0] sm:$0xff]
        %v535 = vld [vmem:[%s210 + $0x2c8] sm:$0xff]
        %v536 = vld [vmem:[%s210 + $0x2d0] sm:$0xff]
        %v537 = vld [vmem:[%s210 + $0x2d8] sm:$0xff]
        %v538 = vld [vmem:[%s210 + $0x2e0] sm:$0xff]
        %v539 = vld [vmem:[%s210 + $0x2e8] sm:$0xff]
        %v540 = vld [vmem:[%s210 + $0x2f0] sm:$0xff]
        %v541 = vld [vmem:[%s210 + $0x2f8] sm:$0xff]
        %v542 = vld [vmem:[%s210 + $0x300] sm:$0xff]
        %v543 = vld [vmem:[%s210 + $0x308] sm:$0xff]
        %v544 = vld [vmem:[%s210 + $0x310] sm:$0xff]
        %v545 = vld [vmem:[%s210 + $0x318] sm:$0xff]
        %v546 = vld [vmem:[%s210 + $0x320] sm:$0xff]
        %v547 = vld [vmem:[%s210 + $0x328] sm:$0xff]
        %v548 = vld [vmem:[%s210 + $0x330] sm:$0xff]
        %v549 = vld [vmem:[%s210 + $0x338] sm:$0xff]
        %v550 = vld [vmem:[%s210 + $0x340] sm:$0xff]
        %v551 = vld [vmem:[%s210 + $0x348] sm:$0xff]
        %v552 = vld [vmem:[%s210 + $0x350] sm:$0xff]
        %v553 = vld [vmem:[%s210 + $0x358] sm:$0xff]
        %v554 = vld [vmem:[%s210 + $0x360] sm:$0xff]
        %v555 = vld [vmem:[%s210 + $0x368] sm:$0xff]
        %v556 = vld [vmem:[%s210 + $0x370] sm:$0xff]
        %v557 = vld [vmem:[%s210 + $0x378] sm:$0xff]
        %v558 = vld [vmem:[%s210 + $0x380] sm:$0xff]
        %v559 = vld [vmem:[%s210 + $0x388] sm:$0xff]
        %v560 = vld [vmem:[%s210 + $0x390] sm:$0xff]
        %v561 = vld [vmem:[%s210 + $0x398] sm:$0xff]
        %v562 = vld [vmem:[%s210 + $0x3a0] sm:$0xff]
        %v563 = vld [vmem:[%s210 + $0x3a8] sm:$0xff]
        %v564 = vld [vmem:[%s210 + $0x3b0] sm:$0xff]
        %v565 = vld [vmem:[%s210 + $0x3b8] sm:$0xff]
        %v566 = vld [vmem:[%s210 + $0x3c0] sm:$0xff]
        %v567 = vld [vmem:[%s210 + $0x3c8] sm:$0xff]
        %v568 = vld [vmem:[%s210 + $0x3d0] sm:$0xff]
        %v569 = vld [vmem:[%s210 + $0x3d8] sm:$0xff]
        %v570 = vld [vmem:[%s210 + $0x3e0] sm:$0xff]
        %v571 = vld [vmem:[%s210 + $0x3e8] sm:$0xff]
        %v572 = vld [vmem:[%s210 + $0x3f0] sm:$0xff]
        %v573 = vld [vmem:[%s210 + $0x3f8] sm:$0xff]
        %v574 = vld [vmem:[%s210 + $0x400] sm:$0xff]
        %v575 = vld [vmem:[%s210 + $0x408] sm:$0xff]
        %v576 = vld [vmem:[%s210 + $0x410] sm:$0xff]
        %v577 = vld [vmem:[%s210 + $0x418] sm:$0xff]
        %v578 = vld [vmem:[%s210 + $0x420] sm:$0xff]
        %v579 = vld [vmem:[%s210 + $0x428] sm:$0xff]
        %v580 = vld [vmem:[%s210 + $0x430] sm:$0xff]
        %v581 = vld [vmem:[%s210 + $0x438] sm:$0xff]
        %v582 = vld [vmem:[%s210 + $0x440] sm:$0xff]
        %v583 = vld [vmem:[%s210 + $0x448] sm:$0xff]
        %v584 = vld [vmem:[%s210 + $0x450] sm:$0xff]
        %v585 = vld [vmem:[%s210 + $0x458] sm:$0xff]
        %v586 = vld [vmem:[%s210 + $0x460] sm:$0xff]
        %v587 = vld [vmem:[%s210 + $0x468] sm:$0xff]
        %v588 = vld [vmem:[%s210 + $0x470] sm:$0xff]
        %v589 = vld [vmem:[%s210 + $0x478] sm:$0xff]
        %v590 = vld [vmem:[%s210 + $0x480] sm:$0xff]
        %v591 = vld [vmem:[%s210 + $0x488] sm:$0xff]
        %v592 = vld [vmem:[%s210 + $0x490] sm:$0xff]
        %v593 = vld [vmem:[%s210 + $0x498] sm:$0xff]
        %v594 = vld [vmem:[%s210 + $0x4a0] sm:$0xff]
        %v595 = vld [vmem:[%s210 + $0x4a8] sm:$0xff]
        %v596 = vld [vmem:[%s210 + $0x4b0] sm:$0xff]
        %v597 = vld [vmem:[%s210 + $0x4b8] sm:$0xff]
        %v598 = vld [vmem:[%s210 + $0x4c0] sm:$0xff]
        %v599 = vld [vmem:[%s210 + $0x4c8] sm:$0xff]
        %v600 = vld [vmem:[%s210 + $0x4d0] sm:$0xff]
        %v601 = vld [vmem:[%s210 + $0x4d8] sm:$0xff]
        %v602 = vld [vmem:[%s210 + $0x4e0] sm:$0xff]
        %v603 = vld [vmem:[%s210 + $0x4e8] sm:$0xff]
        %v604 = vld [vmem:[%s210 + $0x4f0] sm:$0xff]
        %v605 = vld [vmem:[%s210 + $0x4f8] sm:$0xff]
        %v606 = vld [vmem:[%s210 + $0x500] sm:$0xff]
        %v607 = vld [vmem:[%s210 + $0x508] sm:$0xff]
        %v608 = vld [vmem:[%s210 + $0x510] sm:$0xff]
        %v609 = vld [vmem:[%s210 + $0x518] sm:$0xff]
        %v610 = vld [vmem:[%s210 + $0x520] sm:$0xff]
        %v611 = vld [vmem:[%s210 + $0x528] sm:$0xff]
        %v612 = vld [vmem:[%s210 + $0x530] sm:$0xff]
        %v613 = vld [vmem:[%s210 + $0x538] sm:$0xff]
        %v614 = vld [vmem:[%s210 + $0x540] sm:$0xff]
        %v615 = vld [vmem:[%s210 + $0x548] sm:$0xff]
        %v616 = vld [vmem:[%s210 + $0x550] sm:$0xff]
        %v617 = vld [vmem:[%s210 + $0x558] sm:$0xff]
        %v618 = vld [vmem:[%s210 + $0x560] sm:$0xff]
        %v619 = vld [vmem:[%s210 + $0x568] sm:$0xff]
        %v620 = vld [vmem:[%s210 + $0x570] sm:$0xff]
        %v621 = vld [vmem:[%s210 + $0x578] sm:$0xff]
        %v622 = vld [vmem:[%s210 + $0x580] sm:$0xff]
        %v623 = vld [vmem:[%s210 + $0x588] sm:$0xff]
        %v624 = vld [vmem:[%s210 + $0x590] sm:$0xff]
        %v625 = vld [vmem:[%s210 + $0x598] sm:$0xff]
        %v626 = vld [vmem:[%s210 + $0x5a0] sm:$0xff]
        %v627 = vld [vmem:[%s210 + $0x5a8] sm:$0xff]
        %v628 = vld [vmem:[%s210 + $0x5b0] sm:$0xff]
        %v629 = vld [vmem:[%s210 + $0x5b8] sm:$0xff]
        %v630 = vld [vmem:[%s210 + $0x5c0] sm:$0xff]
        %v631 = vld [vmem:[%s210 + $0x5c8] sm:$0xff]
        %v632 = vld [vmem:[%s210 + $0x5d0] sm:$0xff]
        %v633 = vld [vmem:[%s210 + $0x5d8] sm:$0xff]
        %v634 = vld [vmem:[%s210 + $0x5e0] sm:$0xff]
        %v635 = vld [vmem:[%s210 + $0x5e8] sm:$0xff]
        %v636 = vld [vmem:[%s210 + $0x5f0] sm:$0xff]
        %v637 = vld [vmem:[%s210 + $0x5f8] sm:$0xff]
        %v638 = vld [vmem:[%s210 + $0x600] sm:$0xff]
        %v639 = vld [vmem:[%s210 + $0x608] sm:$0xff]
        %v640 = vld [vmem:[%s210 + $0x610] sm:$0xff]
        %v641 = vld [vmem:[%s210 + $0x618] sm:$0xff]
        %s642 = smul.u32 %s24, 2
        %s643 = sadd.s32 %s642, %s25
        %s644 = smul.u32 %s643, 1568
        %v645 = vlaneseq
        %v646 = vshrl.u32 %v645, 7
        %v647 = vadd.s32 %v646, 8
        %v648 = vadd.s32 %v646, 16
        %v649 = vadd.s32 %v646, 24
        %v650 = vadd.s32 %v646, 32
        %v651 = vadd.s32 %v646, 40
        %v652 = vadd.s32 %v646, 48
        %v653 = vadd.s32 %v646, 56
        %v654 = vadd.s32 %v646, 64
        %v655 = vadd.s32 %v646, 72
        %v656 = vadd.s32 %v646, 80
        %v657 = vadd.s32 %v646, 88
        %v658 = vadd.s32 %v646, 96
        %v659 = vadd.s32 %v646, 104
        %v660 = vadd.s32 %v646, 112
        %v661 = vadd.s32 %v646, 120
        %v662 = vadd.s32 %v646, 128
        %v663 = vadd.s32 %v646, 136
        %v664 = vadd.s32 %v646, 144
        %v665 = vadd.s32 %v646, 152
        %v666 = vadd.s32 %v646, 160
        %v667 = vadd.s32 %v646, 168
        %v668 = vadd.s32 %v646, 176
        %v669 = vadd.s32 %v646, 184
        %v670 = vadd.s32 %v646, 192
        %v671 = vadd.s32 %v646, 200
        %v672 = vadd.s32 %v646, 208
        %v673 = vadd.s32 %v646, 216
        %v674 = vadd.s32 %v646, 224
        %v675 = vadd.s32 %v646, 232
        %v676 = vadd.s32 %v646, 240
        %v677 = vadd.s32 %v646, 248
        %v678 = vadd.s32 %v646, 256
        %v679 = vadd.s32 %v646, 264
        %v680 = vadd.s32 %v646, 272
        %v681 = vadd.s32 %v646, 280
        %v682 = vadd.s32 %v646, 288
        %v683 = vadd.s32 %v646, 296
        %v684 = vadd.s32 %v646, 304
        %v685 = vadd.s32 %v646, 312
        %v686 = vadd.s32 %v646, 320
        %v687 = vadd.s32 %v646, 328
        %v688 = vadd.s32 %v646, 336
        %v689 = vadd.s32 %v646, 344
        %v690 = vadd.s32 %v646, 352
        %v691 = vadd.s32 %v646, 360
        %v692 = vadd.s32 %v646, 368
        %v693 = vadd.s32 %v646, 376
        %v694 = vadd.s32 %v646, 384
        %v695 = vadd.s32 %v646, 392
        %v696 = vadd.s32 %v646, 400
        %v697 = vadd.s32 %v646, 408
        %v698 = vadd.s32 %v646, 416
        %v699 = vadd.s32 %v646, 424
        %v700 = vadd.s32 %v646, 432
        %v701 = vadd.s32 %v646, 440
        %v702 = vadd.s32 %v646, 448
        %v703 = vadd.s32 %v646, 456
        %v704 = vadd.s32 %v646, 464
        %v705 = vadd.s32 %v646, 472
        %v706 = vadd.s32 %v646, 480
        %v707 = vadd.s32 %v646, 488
        %v708 = vadd.s32 %v646, 496
        %v709 = vadd.s32 %v646, 504
        %v710 = vadd.s32 %v646, 512
        %v711 = vadd.s32 %v646, 520
        %v712 = vadd.s32 %v646, 528
        %v713 = vadd.s32 %v646, 536
        %v714 = vadd.s32 %v646, 544
        %v715 = vadd.s32 %v646, 552
        %v716 = vadd.s32 %v646, 560
        %v717 = vadd.s32 %v646, 568
        %v718 = vadd.s32 %v646, 576
        %v719 = vadd.s32 %v646, 584
        %v720 = vadd.s32 %v646, 592
        %v721 = vadd.s32 %v646, 600
        %v722 = vadd.s32 %v646, 608
        %v723 = vadd.s32 %v646, 616
        %v724 = vadd.s32 %v646, 624
        %v725 = vadd.s32 %v646, 632
        %v726 = vadd.s32 %v646, 640
        %v727 = vadd.s32 %v646, 648
        %v728 = vadd.s32 %v646, 656
        %v729 = vadd.s32 %v646, 664
        %v730 = vadd.s32 %v646, 672
        %v731 = vadd.s32 %v646, 680
        %v732 = vadd.s32 %v646, 688
        %v733 = vadd.s32 %v646, 696
        %v734 = vadd.s32 %v646, 704
        %v735 = vadd.s32 %v646, 712
        %v736 = vadd.s32 %v646, 720
        %v737 = vadd.s32 %v646, 728
        %v738 = vadd.s32 %v646, 736
        %v739 = vadd.s32 %v646, 744
        %v740 = vadd.s32 %v646, 752
        %v741 = vadd.s32 %v646, 760
        %v742 = vadd.s32 %v646, 768
        %v743 = vadd.s32 %v646, 776
        %v744 = vadd.s32 %v646, 784
        %v745 = vadd.s32 %v646, 792
        %v746 = vadd.s32 %v646, 800
        %v747 = vadd.s32 %v646, 808
        %v748 = vadd.s32 %v646, 816
        %v749 = vadd.s32 %v646, 824
        %v750 = vadd.s32 %v646, 832
        %v751 = vadd.s32 %v646, 840
        %v752 = vadd.s32 %v646, 848
        %v753 = vadd.s32 %v646, 856
        %v754 = vadd.s32 %v646, 864
        %v755 = vadd.s32 %v646, 872
        %v756 = vadd.s32 %v646, 880
        %v757 = vadd.s32 %v646, 888
        %v758 = vadd.s32 %v646, 896
        %v759 = vadd.s32 %v646, 904
        %v760 = vadd.s32 %v646, 912
        %v761 = vadd.s32 %v646, 920
        %v762 = vadd.s32 %v646, 928
        %v763 = vadd.s32 %v646, 936
        %v764 = vadd.s32 %v646, 944
        %v765 = vadd.s32 %v646, 952
        %v766 = vadd.s32 %v646, 960
        %v767 = vadd.s32 %v646, 968
        %v768 = vadd.s32 %v646, 976
        %v769 = vadd.s32 %v646, 984
        %v770 = vadd.s32 %v646, 992
        %v771 = vadd.s32 %v646, 1000
        %v772 = vadd.s32 %v646, 1008
        %v773 = vadd.s32 %v646, 1016
        %v774 = vadd.s32 %v646, 1024
        %v775 = vadd.s32 %v646, 1032
        %v776 = vadd.s32 %v646, 1040
        %v777 = vadd.s32 %v646, 1048
        %v778 = vadd.s32 %v646, 1056
        %v779 = vadd.s32 %v646, 1064
        %v780 = vadd.s32 %v646, 1072
        %v781 = vadd.s32 %v646, 1080
        %v782 = vadd.s32 %v646, 1088
        %v783 = vadd.s32 %v646, 1096
        %v784 = vadd.s32 %v646, 1104
        %v785 = vadd.s32 %v646, 1112
        %v786 = vadd.s32 %v646, 1120
        %v787 = vadd.s32 %v646, 1128
        %v788 = vadd.s32 %v646, 1136
        %v789 = vadd.s32 %v646, 1144
        %v790 = vadd.s32 %v646, 1152
        %v791 = vadd.s32 %v646, 1160
        %v792 = vadd.s32 %v646, 1168
        %v793 = vadd.s32 %v646, 1176
        %v794 = vadd.s32 %v646, 1184
        %v795 = vadd.s32 %v646, 1192
        %v796 = vadd.s32 %v646, 1200
        %v797 = vadd.s32 %v646, 1208
        %v798 = vadd.s32 %v646, 1216
        %v799 = vadd.s32 %v646, 1224
        %v800 = vadd.s32 %v646, 1232
        %v801 = vadd.s32 %v646, 1240
        %v802 = vadd.s32 %v646, 1248
        %v803 = vadd.s32 %v646, 1256
        %v804 = vadd.s32 %v646, 1264
        %v805 = vadd.s32 %v646, 1272
        %v806 = vadd.s32 %v646, 1280
        %v807 = vadd.s32 %v646, 1288
        %v808 = vadd.s32 %v646, 1296
        %v809 = vadd.s32 %v646, 1304
        %v810 = vadd.s32 %v646, 1312
        %v811 = vadd.s32 %v646, 1320
        %v812 = vadd.s32 %v646, 1328
        %v813 = vadd.s32 %v646, 1336
        %v814 = vadd.s32 %v646, 1344
        %v815 = vadd.s32 %v646, 1352
        %v816 = vadd.s32 %v646, 1360
        %v817 = vadd.s32 %v646, 1368
        %v818 = vadd.s32 %v646, 1376
        %v819 = vadd.s32 %v646, 1384
        %v820 = vadd.s32 %v646, 1392
        %v821 = vadd.s32 %v646, 1400
        %v822 = vadd.s32 %v646, 1408
        %v823 = vadd.s32 %v646, 1416
        %v824 = vadd.s32 %v646, 1424
        %v825 = vadd.s32 %v646, 1432
        %v826 = vadd.s32 %v646, 1440
        %v827 = vadd.s32 %v646, 1448
        %v828 = vadd.s32 %v646, 1456
        %v829 = vadd.s32 %v646, 1464
        %v830 = vadd.s32 %v646, 1472
        %v831 = vadd.s32 %v646, 1480
        %v832 = vadd.s32 %v646, 1488
        %v833 = vadd.s32 %v646, 1496
        %v834 = vadd.s32 %v646, 1504
        %v835 = vadd.s32 %v646, 1512
        %v836 = vadd.s32 %v646, 1520
        %v837 = vadd.s32 %v646, 1528
        %v838 = vadd.s32 %v646, 1536
        %v839 = vadd.s32 %v646, 1544
        %v840 = vadd.s32 %v646, 1552
        %v841 = vadd.s32 %v646, 1560
        %v842 = vstv %s644
        %v843 = vadd.s32 %v842, %v646
        %v844 = vadd.s32 %v842, %v647
        %v845 = vadd.s32 %v842, %v648
        %v846 = vadd.s32 %v842, %v649
        %v847 = vadd.s32 %v842, %v650
        %v848 = vadd.s32 %v842, %v651
        %v849 = vadd.s32 %v842, %v652
        %v850 = vadd.s32 %v842, %v653
        %v851 = vadd.s32 %v842, %v654
        %v852 = vadd.s32 %v842, %v655
        %v853 = vadd.s32 %v842, %v656
        %v854 = vadd.s32 %v842, %v657
        %v855 = vadd.s32 %v842, %v658
        %v856 = vadd.s32 %v842, %v659
        %v857 = vadd.s32 %v842, %v660
        %v858 = vadd.s32 %v842, %v661
        %v859 = vadd.s32 %v842, %v662
        %v860 = vadd.s32 %v842, %v663
        %v861 = vadd.s32 %v842, %v664
        %v862 = vadd.s32 %v842, %v665
        %v863 = vadd.s32 %v842, %v666
        %v864 = vadd.s32 %v842, %v667
        %v865 = vadd.s32 %v842, %v668
        %v866 = vadd.s32 %v842, %v669
        %v867 = vadd.s32 %v842, %v670
        %v868 = vadd.s32 %v842, %v671
        %v869 = vadd.s32 %v842, %v672
        %v870 = vadd.s32 %v842, %v673
        %v871 = vadd.s32 %v842, %v674
        %v872 = vadd.s32 %v842, %v675
        %v873 = vadd.s32 %v842, %v676
        %v874 = vadd.s32 %v842, %v677
        %v875 = vadd.s32 %v842, %v678
        %v876 = vadd.s32 %v842, %v679
        %v877 = vadd.s32 %v842, %v680
        %v878 = vadd.s32 %v842, %v681
        %v879 = vadd.s32 %v842, %v682
        %v880 = vadd.s32 %v842, %v683
        %v881 = vadd.s32 %v842, %v684
        %v882 = vadd.s32 %v842, %v685
        %v883 = vadd.s32 %v842, %v686
        %v884 = vadd.s32 %v842, %v687
        %v885 = vadd.s32 %v842, %v688
        %v886 = vadd.s32 %v842, %v689
        %v887 = vadd.s32 %v842, %v690
        %v888 = vadd.s32 %v842, %v691
        %v889 = vadd.s32 %v842, %v692
        %v890 = vadd.s32 %v842, %v693
        %v891 = vadd.s32 %v842, %v694
        %v892 = vadd.s32 %v842, %v695
        %v893 = vadd.s32 %v842, %v696
        %v894 = vadd.s32 %v842, %v697
        %v895 = vadd.s32 %v842, %v698
        %v896 = vadd.s32 %v842, %v699
        %v897 = vadd.s32 %v842, %v700
        %v898 = vadd.s32 %v842, %v701
        %v899 = vadd.s32 %v842, %v702
        %v900 = vadd.s32 %v842, %v703
        %v901 = vadd.s32 %v842, %v704
        %v902 = vadd.s32 %v842, %v705
        %v903 = vadd.s32 %v842, %v706
        %v904 = vadd.s32 %v842, %v707
        %v905 = vadd.s32 %v842, %v708
        %v906 = vadd.s32 %v842, %v709
        %v907 = vadd.s32 %v842, %v710
        %v908 = vadd.s32 %v842, %v711
        %v909 = vadd.s32 %v842, %v712
        %v910 = vadd.s32 %v842, %v713
        %v911 = vadd.s32 %v842, %v714
        %v912 = vadd.s32 %v842, %v715
        %v913 = vadd.s32 %v842, %v716
        %v914 = vadd.s32 %v842, %v717
        %v915 = vadd.s32 %v842, %v718
        %v916 = vadd.s32 %v842, %v719
        %v917 = vadd.s32 %v842, %v720
        %v918 = vadd.s32 %v842, %v721
        %v919 = vadd.s32 %v842, %v722
        %v920 = vadd.s32 %v842, %v723
        %v921 = vadd.s32 %v842, %v724
        %v922 = vadd.s32 %v842, %v725
        %v923 = vadd.s32 %v842, %v726
        %v924 = vadd.s32 %v842, %v727
        %v925 = vadd.s32 %v842, %v728
        %v926 = vadd.s32 %v842, %v729
        %v927 = vadd.s32 %v842, %v730
        %v928 = vadd.s32 %v842, %v731
        %v929 = vadd.s32 %v842, %v732
        %v930 = vadd.s32 %v842, %v733
        %v931 = vadd.s32 %v842, %v734
        %v932 = vadd.s32 %v842, %v735
        %v933 = vadd.s32 %v842, %v736
        %v934 = vadd.s32 %v842, %v737
        %v935 = vadd.s32 %v842, %v738
        %v936 = vadd.s32 %v842, %v739
        %v937 = vadd.s32 %v842, %v740
        %v938 = vadd.s32 %v842, %v741
        %v939 = vadd.s32 %v842, %v742
        %v940 = vadd.s32 %v842, %v743
        %v941 = vadd.s32 %v842, %v744
        %v942 = vadd.s32 %v842, %v745
        %v943 = vadd.s32 %v842, %v746
        %v944 = vadd.s32 %v842, %v747
        %v945 = vadd.s32 %v842, %v748
        %v946 = vadd.s32 %v842, %v749
        %v947 = vadd.s32 %v842, %v750
        %v948 = vadd.s32 %v842, %v751
        %v949 = vadd.s32 %v842, %v752
        %v950 = vadd.s32 %v842, %v753
        %v951 = vadd.s32 %v842, %v754
        %v952 = vadd.s32 %v842, %v755
        %v953 = vadd.s32 %v842, %v756
        %v954 = vadd.s32 %v842, %v757
        %v955 = vadd.s32 %v842, %v758
        %v956 = vadd.s32 %v842, %v759
        %v957 = vadd.s32 %v842, %v760
        %v958 = vadd.s32 %v842, %v761
        %v959 = vadd.s32 %v842, %v762
        %v960 = vadd.s32 %v842, %v763
        %v961 = vadd.s32 %v842, %v764
        %v962 = vadd.s32 %v842, %v765
        %v963 = vadd.s32 %v842, %v766
        %v964 = vadd.s32 %v842, %v767
        %v965 = vadd.s32 %v842, %v768
        %v966 = vadd.s32 %v842, %v769
        %v967 = vadd.s32 %v842, %v770
        %v968 = vadd.s32 %v842, %v771
        %v969 = vadd.s32 %v842, %v772
        %v970 = vadd.s32 %v842, %v773
        %v971 = vadd.s32 %v842, %v774
        %v972 = vadd.s32 %v842, %v775
        %v973 = vadd.s32 %v842, %v776
        %v974 = vadd.s32 %v842, %v777
        %v975 = vadd.s32 %v842, %v778
        %v976 = vadd.s32 %v842, %v779
        %v977 = vadd.s32 %v842, %v780
        %v978 = vadd.s32 %v842, %v781
        %v979 = vadd.s32 %v842, %v782
        %v980 = vadd.s32 %v842, %v783
        %v981 = vadd.s32 %v842, %v784
        %v982 = vadd.s32 %v842, %v785
        %v983 = vadd.s32 %v842, %v786
        %v984 = vadd.s32 %v842, %v787
        %v985 = vadd.s32 %v842, %v788
        %v986 = vadd.s32 %v842, %v789
        %v987 = vadd.s32 %v842, %v790
        %v988 = vadd.s32 %v842, %v791
        %v989 = vadd.s32 %v842, %v792
        %v990 = vadd.s32 %v842, %v793
        %v991 = vadd.s32 %v842, %v794
        %v992 = vadd.s32 %v842, %v795
        %v993 = vadd.s32 %v842, %v796
        %v994 = vadd.s32 %v842, %v797
        %v995 = vadd.s32 %v842, %v798
        %v996 = vadd.s32 %v842, %v799
        %v997 = vadd.s32 %v842, %v800
        %v998 = vadd.s32 %v842, %v801
        %v999 = vadd.s32 %v842, %v802
        %v1000 = vadd.s32 %v842, %v803
        %v1001 = vadd.s32 %v842, %v804
        %v1002 = vadd.s32 %v842, %v805
        %v1003 = vadd.s32 %v842, %v806
        %v1004 = vadd.s32 %v842, %v807
        %v1005 = vadd.s32 %v842, %v808
        %v1006 = vadd.s32 %v842, %v809
        %v1007 = vadd.s32 %v842, %v810
        %v1008 = vadd.s32 %v842, %v811
        %v1009 = vadd.s32 %v842, %v812
        %v1010 = vadd.s32 %v842, %v813
        %v1011 = vadd.s32 %v842, %v814
        %v1012 = vadd.s32 %v842, %v815
        %v1013 = vadd.s32 %v842, %v816
        %v1014 = vadd.s32 %v842, %v817
        %v1015 = vadd.s32 %v842, %v818
        %v1016 = vadd.s32 %v842, %v819
        %v1017 = vadd.s32 %v842, %v820
        %v1018 = vadd.s32 %v842, %v821
        %v1019 = vadd.s32 %v842, %v822
        %v1020 = vadd.s32 %v842, %v823
        %v1021 = vadd.s32 %v842, %v824
        %v1022 = vadd.s32 %v842, %v825
        %v1023 = vadd.s32 %v842, %v826
        %v1024 = vadd.s32 %v842, %v827
        %v1025 = vadd.s32 %v842, %v828
        %v1026 = vadd.s32 %v842, %v829
        %v1027 = vadd.s32 %v842, %v830
        %v1028 = vadd.s32 %v842, %v831
        %v1029 = vadd.s32 %v842, %v832
        %v1030 = vadd.s32 %v842, %v833
        %v1031 = vadd.s32 %v842, %v834
        %v1032 = vadd.s32 %v842, %v835
        %v1033 = vadd.s32 %v842, %v836
        %v1034 = vadd.s32 %v842, %v837
        %v1035 = vadd.s32 %v842, %v838
        %v1036 = vadd.s32 %v842, %v839
        %v1037 = vadd.s32 %v842, %v840
        %v1038 = vadd.s32 %v842, %v841
        %vm1039 = vcmp.lt.s32.totalorder %v843, 3125
        %vm1040 = vcmp.lt.s32.totalorder %v844, 3125
        %vm1041 = vcmp.lt.s32.totalorder %v845, 3125
        %vm1042 = vcmp.lt.s32.totalorder %v846, 3125
        %vm1043 = vcmp.lt.s32.totalorder %v847, 3125
        %vm1044 = vcmp.lt.s32.totalorder %v848, 3125
        %vm1045 = vcmp.lt.s32.totalorder %v849, 3125
        %vm1046 = vcmp.lt.s32.totalorder %v850, 3125
        %vm1047 = vcmp.lt.s32.totalorder %v851, 3125
        %vm1048 = vcmp.lt.s32.totalorder %v852, 3125
        %vm1049 = vcmp.lt.s32.totalorder %v853, 3125
        %vm1050 = vcmp.lt.s32.totalorder %v854, 3125
        %vm1051 = vcmp.lt.s32.totalorder %v855, 3125
        %vm1052 = vcmp.lt.s32.totalorder %v856, 3125
        %vm1053 = vcmp.lt.s32.totalorder %v857, 3125
        %vm1054 = vcmp.lt.s32.totalorder %v858, 3125
        %vm1055 = vcmp.lt.s32.totalorder %v859, 3125
        %vm1056 = vcmp.lt.s32.totalorder %v860, 3125
        %vm1057 = vcmp.lt.s32.totalorder %v861, 3125
        %vm1058 = vcmp.lt.s32.totalorder %v862, 3125
        %vm1059 = vcmp.lt.s32.totalorder %v863, 3125
        %vm1060 = vcmp.lt.s32.totalorder %v864, 3125
        %vm1061 = vcmp.lt.s32.totalorder %v865, 3125
        %vm1062 = vcmp.lt.s32.totalorder %v866, 3125
        %vm1063 = vcmp.lt.s32.totalorder %v867, 3125
        %vm1064 = vcmp.lt.s32.totalorder %v868, 3125
        %vm1065 = vcmp.lt.s32.totalorder %v869, 3125
        %vm1066 = vcmp.lt.s32.totalorder %v870, 3125
        %vm1067 = vcmp.lt.s32.totalorder %v871, 3125
        %vm1068 = vcmp.lt.s32.totalorder %v872, 3125
        %vm1069 = vcmp.lt.s32.totalorder %v873, 3125
        %vm1070 = vcmp.lt.s32.totalorder %v874, 3125
        %vm1071 = vcmp.lt.s32.totalorder %v875, 3125
        %vm1072 = vcmp.lt.s32.totalorder %v876, 3125
        %vm1073 = vcmp.lt.s32.totalorder %v877, 3125
        %vm1074 = vcmp.lt.s32.totalorder %v878, 3125
        %vm1075 = vcmp.lt.s32.totalorder %v879, 3125
        %vm1076 = vcmp.lt.s32.totalorder %v880, 3125
        %vm1077 = vcmp.lt.s32.totalorder %v881, 3125
        %vm1078 = vcmp.lt.s32.totalorder %v882, 3125
        %vm1079 = vcmp.lt.s32.totalorder %v883, 3125
        %vm1080 = vcmp.lt.s32.totalorder %v884, 3125
        %vm1081 = vcmp.lt.s32.totalorder %v885, 3125
        %vm1082 = vcmp.lt.s32.totalorder %v886, 3125
        %vm1083 = vcmp.lt.s32.totalorder %v887, 3125
        %vm1084 = vcmp.lt.s32.totalorder %v888, 3125
        %vm1085 = vcmp.lt.s32.totalorder %v889, 3125
        %vm1086 = vcmp.lt.s32.totalorder %v890, 3125
        %vm1087 = vcmp.lt.s32.totalorder %v891, 3125
        %vm1088 = vcmp.lt.s32.totalorder %v892, 3125
        %vm1089 = vcmp.lt.s32.totalorder %v893, 3125
        %vm1090 = vcmp.lt.s32.totalorder %v894, 3125
        %vm1091 = vcmp.lt.s32.totalorder %v895, 3125
        %vm1092 = vcmp.lt.s32.totalorder %v896, 3125
        %vm1093 = vcmp.lt.s32.totalorder %v897, 3125
        %vm1094 = vcmp.lt.s32.totalorder %v898, 3125
        %vm1095 = vcmp.lt.s32.totalorder %v899, 3125
        %vm1096 = vcmp.lt.s32.totalorder %v900, 3125
        %vm1097 = vcmp.lt.s32.totalorder %v901, 3125
        %vm1098 = vcmp.lt.s32.totalorder %v902, 3125
        %vm1099 = vcmp.lt.s32.totalorder %v903, 3125
        %vm1100 = vcmp.lt.s32.totalorder %v904, 3125
        %vm1101 = vcmp.lt.s32.totalorder %v905, 3125
        %vm1102 = vcmp.lt.s32.totalorder %v906, 3125
        %vm1103 = vcmp.lt.s32.totalorder %v907, 3125
        %vm1104 = vcmp.lt.s32.totalorder %v908, 3125
        %vm1105 = vcmp.lt.s32.totalorder %v909, 3125
        %vm1106 = vcmp.lt.s32.totalorder %v910, 3125
        %vm1107 = vcmp.lt.s32.totalorder %v911, 3125
        %vm1108 = vcmp.lt.s32.totalorder %v912, 3125
        %vm1109 = vcmp.lt.s32.totalorder %v913, 3125
        %vm1110 = vcmp.lt.s32.totalorder %v914, 3125
        %vm1111 = vcmp.lt.s32.totalorder %v915, 3125
        %vm1112 = vcmp.lt.s32.totalorder %v916, 3125
        %vm1113 = vcmp.lt.s32.totalorder %v917, 3125
        %vm1114 = vcmp.lt.s32.totalorder %v918, 3125
        %vm1115 = vcmp.lt.s32.totalorder %v919, 3125
        %vm1116 = vcmp.lt.s32.totalorder %v920, 3125
        %vm1117 = vcmp.lt.s32.totalorder %v921, 3125
        %vm1118 = vcmp.lt.s32.totalorder %v922, 3125
        %vm1119 = vcmp.lt.s32.totalorder %v923, 3125
        %vm1120 = vcmp.lt.s32.totalorder %v924, 3125
        %vm1121 = vcmp.lt.s32.totalorder %v925, 3125
        %vm1122 = vcmp.lt.s32.totalorder %v926, 3125
        %vm1123 = vcmp.lt.s32.totalorder %v927, 3125
        %vm1124 = vcmp.lt.s32.totalorder %v928, 3125
        %vm1125 = vcmp.lt.s32.totalorder %v929, 3125
        %vm1126 = vcmp.lt.s32.totalorder %v930, 3125
        %vm1127 = vcmp.lt.s32.totalorder %v931, 3125
        %vm1128 = vcmp.lt.s32.totalorder %v932, 3125
        %vm1129 = vcmp.lt.s32.totalorder %v933, 3125
        %vm1130 = vcmp.lt.s32.totalorder %v934, 3125
        %vm1131 = vcmp.lt.s32.totalorder %v935, 3125
        %vm1132 = vcmp.lt.s32.totalorder %v936, 3125
        %vm1133 = vcmp.lt.s32.totalorder %v937, 3125
        %vm1134 = vcmp.lt.s32.totalorder %v938, 3125
        %vm1135 = vcmp.lt.s32.totalorder %v939, 3125
        %vm1136 = vcmp.lt.s32.totalorder %v940, 3125
        %vm1137 = vcmp.lt.s32.totalorder %v941, 3125
        %vm1138 = vcmp.lt.s32.totalorder %v942, 3125
        %vm1139 = vcmp.lt.s32.totalorder %v943, 3125
        %vm1140 = vcmp.lt.s32.totalorder %v944, 3125
        %vm1141 = vcmp.lt.s32.totalorder %v945, 3125
        %vm1142 = vcmp.lt.s32.totalorder %v946, 3125
        %vm1143 = vcmp.lt.s32.totalorder %v947, 3125
        %vm1144 = vcmp.lt.s32.totalorder %v948, 3125
        %vm1145 = vcmp.lt.s32.totalorder %v949, 3125
        %vm1146 = vcmp.lt.s32.totalorder %v950, 3125
        %vm1147 = vcmp.lt.s32.totalorder %v951, 3125
        %vm1148 = vcmp.lt.s32.totalorder %v952, 3125
        %vm1149 = vcmp.lt.s32.totalorder %v953, 3125
        %vm1150 = vcmp.lt.s32.totalorder %v954, 3125
        %vm1151 = vcmp.lt.s32.totalorder %v955, 3125
        %vm1152 = vcmp.lt.s32.totalorder %v956, 3125
        %vm1153 = vcmp.lt.s32.totalorder %v957, 3125
        %vm1154 = vcmp.lt.s32.totalorder %v958, 3125
        %vm1155 = vcmp.lt.s32.totalorder %v959, 3125
        %vm1156 = vcmp.lt.s32.totalorder %v960, 3125
        %vm1157 = vcmp.lt.s32.totalorder %v961, 3125
        %vm1158 = vcmp.lt.s32.totalorder %v962, 3125
        %vm1159 = vcmp.lt.s32.totalorder %v963, 3125
        %vm1160 = vcmp.lt.s32.totalorder %v964, 3125
        %vm1161 = vcmp.lt.s32.totalorder %v965, 3125
        %vm1162 = vcmp.lt.s32.totalorder %v966, 3125
        %vm1163 = vcmp.lt.s32.totalorder %v967, 3125
        %vm1164 = vcmp.lt.s32.totalorder %v968, 3125
        %vm1165 = vcmp.lt.s32.totalorder %v969, 3125
        %vm1166 = vcmp.lt.s32.totalorder %v970, 3125
        %vm1167 = vcmp.lt.s32.totalorder %v971, 3125
        %vm1168 = vcmp.lt.s32.totalorder %v972, 3125
        %vm1169 = vcmp.lt.s32.totalorder %v973, 3125
        %vm1170 = vcmp.lt.s32.totalorder %v974, 3125
        %vm1171 = vcmp.lt.s32.totalorder %v975, 3125
        %vm1172 = vcmp.lt.s32.totalorder %v976, 3125
        %vm1173 = vcmp.lt.s32.totalorder %v977, 3125
        %vm1174 = vcmp.lt.s32.totalorder %v978, 3125
        %vm1175 = vcmp.lt.s32.totalorder %v979, 3125
        %vm1176 = vcmp.lt.s32.totalorder %v980, 3125
        %vm1177 = vcmp.lt.s32.totalorder %v981, 3125
        %vm1178 = vcmp.lt.s32.totalorder %v982, 3125
        %vm1179 = vcmp.lt.s32.totalorder %v983, 3125
        %vm1180 = vcmp.lt.s32.totalorder %v984, 3125
        %vm1181 = vcmp.lt.s32.totalorder %v985, 3125
        %vm1182 = vcmp.lt.s32.totalorder %v986, 3125
        %vm1183 = vcmp.lt.s32.totalorder %v987, 3125
        %vm1184 = vcmp.lt.s32.totalorder %v988, 3125
        %vm1185 = vcmp.lt.s32.totalorder %v989, 3125
        %vm1186 = vcmp.lt.s32.totalorder %v990, 3125
        %vm1187 = vcmp.lt.s32.totalorder %v991, 3125
        %vm1188 = vcmp.lt.s32.totalorder %v992, 3125
        %vm1189 = vcmp.lt.s32.totalorder %v993, 3125
        %vm1190 = vcmp.lt.s32.totalorder %v994, 3125
        %vm1191 = vcmp.lt.s32.totalorder %v995, 3125
        %vm1192 = vcmp.lt.s32.totalorder %v996, 3125
        %vm1193 = vcmp.lt.s32.totalorder %v997, 3125
        %vm1194 = vcmp.lt.s32.totalorder %v998, 3125
        %vm1195 = vcmp.lt.s32.totalorder %v999, 3125
        %vm1196 = vcmp.lt.s32.totalorder %v1000, 3125
        %vm1197 = vcmp.lt.s32.totalorder %v1001, 3125
        %vm1198 = vcmp.lt.s32.totalorder %v1002, 3125
        %vm1199 = vcmp.lt.s32.totalorder %v1003, 3125
        %vm1200 = vcmp.lt.s32.totalorder %v1004, 3125
        %vm1201 = vcmp.lt.s32.totalorder %v1005, 3125
        %vm1202 = vcmp.lt.s32.totalorder %v1006, 3125
        %vm1203 = vcmp.lt.s32.totalorder %v1007, 3125
        %vm1204 = vcmp.lt.s32.totalorder %v1008, 3125
        %vm1205 = vcmp.lt.s32.totalorder %v1009, 3125
        %vm1206 = vcmp.lt.s32.totalorder %v1010, 3125
        %vm1207 = vcmp.lt.s32.totalorder %v1011, 3125
        %vm1208 = vcmp.lt.s32.totalorder %v1012, 3125
        %vm1209 = vcmp.lt.s32.totalorder %v1013, 3125
        %vm1210 = vcmp.lt.s32.totalorder %v1014, 3125
        %vm1211 = vcmp.lt.s32.totalorder %v1015, 3125
        %vm1212 = vcmp.lt.s32.totalorder %v1016, 3125
        %vm1213 = vcmp.lt.s32.totalorder %v1017, 3125
        %vm1214 = vcmp.lt.s32.totalorder %v1018, 3125
        %vm1215 = vcmp.lt.s32.totalorder %v1019, 3125
        %vm1216 = vcmp.lt.s32.totalorder %v1020, 3125
        %vm1217 = vcmp.lt.s32.totalorder %v1021, 3125
        %vm1218 = vcmp.lt.s32.totalorder %v1022, 3125
        %vm1219 = vcmp.lt.s32.totalorder %v1023, 3125
        %vm1220 = vcmp.lt.s32.totalorder %v1024, 3125
        %vm1221 = vcmp.lt.s32.totalorder %v1025, 3125
        %vm1222 = vcmp.lt.s32.totalorder %v1026, 3125
        %vm1223 = vcmp.lt.s32.totalorder %v1027, 3125
        %vm1224 = vcmp.lt.s32.totalorder %v1028, 3125
        %vm1225 = vcmp.lt.s32.totalorder %v1029, 3125
        %vm1226 = vcmp.lt.s32.totalorder %v1030, 3125
        %vm1227 = vcmp.lt.s32.totalorder %v1031, 3125
        %vm1228 = vcmp.lt.s32.totalorder %v1032, 3125
        %vm1229 = vcmp.lt.s32.totalorder %v1033, 3125
        %vm1230 = vcmp.lt.s32.totalorder %v1034, 3125
        %vm1231 = vcmp.lt.s32.totalorder %v1035, 3125
        %vm1232 = vcmp.lt.s32.totalorder %v1036, 3125
        %vm1233 = vcmp.lt.s32.totalorder %v1037, 3125
        %vm1234 = vcmp.lt.s32.totalorder %v1038, 3125
        %v1235 = vsub.f32 %v250, %v446
        %v1236 = vsub.f32 %v251, %v447
        %v1237 = vsub.f32 %v252, %v448
        %v1238 = vsub.f32 %v253, %v449
        %v1239 = vsub.f32 %v254, %v450
        %v1240 = vsub.f32 %v255, %v451
        %v1241 = vsub.f32 %v256, %v452
        %v1242 = vsub.f32 %v257, %v453
        %v1243 = vsub.f32 %v258, %v454
        %v1244 = vsub.f32 %v259, %v455
        %v1245 = vsub.f32 %v260, %v456
        %v1246 = vsub.f32 %v261, %v457
        %v1247 = vsub.f32 %v262, %v458
        %v1248 = vsub.f32 %v263, %v459
        %v1249 = vsub.f32 %v264, %v460
        %v1250 = vsub.f32 %v265, %v461
        %v1251 = vsub.f32 %v266, %v462
        %v1252 = vsub.f32 %v267, %v463
        %v1253 = vsub.f32 %v268, %v464
        %v1254 = vsub.f32 %v269, %v465
        %v1255 = vsub.f32 %v270, %v466
        %v1256 = vsub.f32 %v271, %v467
        %v1257 = vsub.f32 %v272, %v468
        %v1258 = vsub.f32 %v273, %v469
        %v1259 = vsub.f32 %v274, %v470
        %v1260 = vsub.f32 %v275, %v471
        %v1261 = vsub.f32 %v276, %v472
        %v1262 = vsub.f32 %v277, %v473
        %v1263 = vsub.f32 %v278, %v474
        %v1264 = vsub.f32 %v279, %v475
        %v1265 = vsub.f32 %v280, %v476
        %v1266 = vsub.f32 %v281, %v477
        %v1267 = vsub.f32 %v282, %v478
        %v1268 = vsub.f32 %v283, %v479
        %v1269 = vsub.f32 %v284, %v480
        %v1270 = vsub.f32 %v285, %v481
        %v1271 = vsub.f32 %v286, %v482
        %v1272 = vsub.f32 %v287, %v483
        %v1273 = vsub.f32 %v288, %v484
        %v1274 = vsub.f32 %v289, %v485
        %v1275 = vsub.f32 %v290, %v486
        %v1276 = vsub.f32 %v291, %v487
        %v1277 = vsub.f32 %v292, %v488
        %v1278 = vsub.f32 %v293, %v489
        %v1279 = vsub.f32 %v294, %v490
        %v1280 = vsub.f32 %v295, %v491
        %v1281 = vsub.f32 %v296, %v492
        %v1282 = vsub.f32 %v297, %v493
        %v1283 = vsub.f32 %v298, %v494
        %v1284 = vsub.f32 %v299, %v495
        %v1285 = vsub.f32 %v300, %v496
        %v1286 = vsub.f32 %v301, %v497
        %v1287 = vsub.f32 %v302, %v498
        %v1288 = vsub.f32 %v303, %v499
        %v1289 = vsub.f32 %v304, %v500
        %v1290 = vsub.f32 %v305, %v501
        %v1291 = vsub.f32 %v306, %v502
        %v1292 = vsub.f32 %v307, %v503
        %v1293 = vsub.f32 %v308, %v504
        %v1294 = vsub.f32 %v309, %v505
        %v1295 = vsub.f32 %v310, %v506
        %v1296 = vsub.f32 %v311, %v507
        %v1297 = vsub.f32 %v312, %v508
        %v1298 = vsub.f32 %v313, %v509
        %v1299 = vsub.f32 %v314, %v510
        %v1300 = vsub.f32 %v315, %v511
        %v1301 = vsub.f32 %v316, %v512
        %v1302 = vsub.f32 %v317, %v513
        %v1303 = vsub.f32 %v318, %v514
        %v1304 = vsub.f32 %v319, %v515
        %v1305 = vsub.f32 %v320, %v516
        %v1306 = vsub.f32 %v321, %v517
        %v1307 = vsub.f32 %v322, %v518
        %v1308 = vsub.f32 %v323, %v519
        %v1309 = vsub.f32 %v324, %v520
        %v1310 = vsub.f32 %v325, %v521
        %v1311 = vsub.f32 %v326, %v522
        %v1312 = vsub.f32 %v327, %v523
        %v1313 = vsub.f32 %v328, %v524
        %v1314 = vsub.f32 %v329, %v525
        %v1315 = vsub.f32 %v330, %v526
        %v1316 = vsub.f32 %v331, %v527
        %v1317 = vsub.f32 %v332, %v528
        %v1318 = vsub.f32 %v333, %v529
        %v1319 = vsub.f32 %v334, %v530
        %v1320 = vsub.f32 %v335, %v531
        %v1321 = vsub.f32 %v336, %v532
        %v1322 = vsub.f32 %v337, %v533
        %v1323 = vsub.f32 %v338, %v534
        %v1324 = vsub.f32 %v339, %v535
        %v1325 = vsub.f32 %v340, %v536
        %v1326 = vsub.f32 %v341, %v537
        %v1327 = vsub.f32 %v342, %v538
        %v1328 = vsub.f32 %v343, %v539
        %v1329 = vsub.f32 %v344, %v540
        %v1330 = vsub.f32 %v345, %v541
        %v1331 = vsub.f32 %v346, %v542
        %v1332 = vsub.f32 %v347, %v543
        %v1333 = vsub.f32 %v348, %v544
        %v1334 = vsub.f32 %v349, %v545
        %v1335 = vsub.f32 %v350, %v546
        %v1336 = vsub.f32 %v351, %v547
        %v1337 = vsub.f32 %v352, %v548
        %v1338 = vsub.f32 %v353, %v549
        %v1339 = vsub.f32 %v354, %v550
        %v1340 = vsub.f32 %v355, %v551
        %v1341 = vsub.f32 %v356, %v552
        %v1342 = vsub.f32 %v357, %v553
        %v1343 = vsub.f32 %v358, %v554
        %v1344 = vsub.f32 %v359, %v555
        %v1345 = vsub.f32 %v360, %v556
        %v1346 = vsub.f32 %v361, %v557
        %v1347 = vsub.f32 %v362, %v558
        %v1348 = vsub.f32 %v363, %v559
        %v1349 = vsub.f32 %v364, %v560
        %v1350 = vsub.f32 %v365, %v561
        %v1351 = vsub.f32 %v366, %v562
        %v1352 = vsub.f32 %v367, %v563
        %v1353 = vsub.f32 %v368, %v564
        %v1354 = vsub.f32 %v369, %v565
        %v1355 = vsub.f32 %v370, %v566
        %v1356 = vsub.f32 %v371, %v567
        %v1357 = vsub.f32 %v372, %v568
        %v1358 = vsub.f32 %v373, %v569
        %v1359 = vsub.f32 %v374, %v570
        %v1360 = vsub.f32 %v375, %v571
        %v1361 = vsub.f32 %v376, %v572
        %v1362 = vsub.f32 %v377, %v573
        %v1363 = vsub.f32 %v378, %v574
        %v1364 = vsub.f32 %v379, %v575
        %v1365 = vsub.f32 %v380, %v576
        %v1366 = vsub.f32 %v381, %v577
        %v1367 = vsub.f32 %v382, %v578
        %v1368 = vsub.f32 %v383, %v579
        %v1369 = vsub.f32 %v384, %v580
        %v1370 = vsub.f32 %v385, %v581
        %v1371 = vsub.f32 %v386, %v582
        %v1372 = vsub.f32 %v387, %v583
        %v1373 = vsub.f32 %v388, %v584
        %v1374 = vsub.f32 %v389, %v585
        %v1375 = vsub.f32 %v390, %v586
        %v1376 = vsub.f32 %v391, %v587
        %v1377 = vsub.f32 %v392, %v588
        %v1378 = vsub.f32 %v393, %v589
        %v1379 = vsub.f32 %v394, %v590
        %v1380 = vsub.f32 %v395, %v591
        %v1381 = vsub.f32 %v396, %v592
        %v1382 = vsub.f32 %v397, %v593
        %v1383 = vsub.f32 %v398, %v594
        %v1384 = vsub.f32 %v399, %v595
        %v1385 = vsub.f32 %v400, %v596
        %v1386 = vsub.f32 %v401, %v597
        %v1387 = vsub.f32 %v402, %v598
        %v1388 = vsub.f32 %v403, %v599
        %v1389 = vsub.f32 %v404, %v600
        %v1390 = vsub.f32 %v405, %v601
        %v1391 = vsub.f32 %v406, %v602
        %v1392 = vsub.f32 %v407, %v603
        %v1393 = vsub.f32 %v408, %v604
        %v1394 = vsub.f32 %v409, %v605
        %v1395 = vsub.f32 %v410, %v606
        %v1396 = vsub.f32 %v411, %v607
        %v1397 = vsub.f32 %v412, %v608
        %v1398 = vsub.f32 %v413, %v609
        %v1399 = vsub.f32 %v414, %v610
        %v1400 = vsub.f32 %v415, %v611
        %v1401 = vsub.f32 %v416, %v612
        %v1402 = vsub.f32 %v417, %v613
        %v1403 = vsub.f32 %v418, %v614
        %v1404 = vsub.f32 %v419, %v615
        %v1405 = vsub.f32 %v420, %v616
        %v1406 = vsub.f32 %v421, %v617
        %v1407 = vsub.f32 %v422, %v618
        %v1408 = vsub.f32 %v423, %v619
        %v1409 = vsub.f32 %v424, %v620
        %v1410 = vsub.f32 %v425, %v621
        %v1411 = vsub.f32 %v426, %v622
        %v1412 = vsub.f32 %v427, %v623
        %v1413 = vsub.f32 %v428, %v624
        %v1414 = vsub.f32 %v429, %v625
        %v1415 = vsub.f32 %v430, %v626
        %v1416 = vsub.f32 %v431, %v627
        %v1417 = vsub.f32 %v432, %v628
        %v1418 = vsub.f32 %v433, %v629
        %v1419 = vsub.f32 %v434, %v630
        %v1420 = vsub.f32 %v435, %v631
        %v1421 = vsub.f32 %v436, %v632
        %v1422 = vsub.f32 %v437, %v633
        %v1423 = vsub.f32 %v438, %v634
        %v1424 = vsub.f32 %v439, %v635
        %v1425 = vsub.f32 %v440, %v636
        %v1426 = vsub.f32 %v441, %v637
        %v1427 = vsub.f32 %v442, %v638
        %v1428 = vsub.f32 %v443, %v639
        %v1429 = vsub.f32 %v444, %v640
        %v1430 = vsub.f32 %v445, %v641
        %v1431 = vsel %vm1039, %v1235, 0.0
        %v1432 = vsel %vm1040, %v1236, 0.0
        %v1433 = vsel %vm1041, %v1237, 0.0
        %v1434 = vsel %vm1042, %v1238, 0.0
        %v1435 = vsel %vm1043, %v1239, 0.0
        %v1436 = vsel %vm1044, %v1240, 0.0
        %v1437 = vsel %vm1045, %v1241, 0.0
        %v1438 = vsel %vm1046, %v1242, 0.0
        %v1439 = vsel %vm1047, %v1243, 0.0
        %v1440 = vsel %vm1048, %v1244, 0.0
        %v1441 = vsel %vm1049, %v1245, 0.0
        %v1442 = vsel %vm1050, %v1246, 0.0
        %v1443 = vsel %vm1051, %v1247, 0.0
        %v1444 = vsel %vm1052, %v1248, 0.0
        %v1445 = vsel %vm1053, %v1249, 0.0
        %v1446 = vsel %vm1054, %v1250, 0.0
        %v1447 = vsel %vm1055, %v1251, 0.0
        %v1448 = vsel %vm1056, %v1252, 0.0
        %v1449 = vsel %vm1057, %v1253, 0.0
        %v1450 = vsel %vm1058, %v1254, 0.0
        %v1451 = vsel %vm1059, %v1255, 0.0
        %v1452 = vsel %vm1060, %v1256, 0.0
        %v1453 = vsel %vm1061, %v1257, 0.0
        %v1454 = vsel %vm1062, %v1258, 0.0
        %v1455 = vsel %vm1063, %v1259, 0.0
        %v1456 = vsel %vm1064, %v1260, 0.0
        %v1457 = vsel %vm1065, %v1261, 0.0
        %v1458 = vsel %vm1066, %v1262, 0.0
        %v1459 = vsel %vm1067, %v1263, 0.0
        %v1460 = vsel %vm1068, %v1264, 0.0
        %v1461 = vsel %vm1069, %v1265, 0.0
        %v1462 = vsel %vm1070, %v1266, 0.0
        %v1463 = vsel %vm1071, %v1267, 0.0
        %v1464 = vsel %vm1072, %v1268, 0.0
        %v1465 = vsel %vm1073, %v1269, 0.0
        %v1466 = vsel %vm1074, %v1270, 0.0
        %v1467 = vsel %vm1075, %v1271, 0.0
        %v1468 = vsel %vm1076, %v1272, 0.0
        %v1469 = vsel %vm1077, %v1273, 0.0
        %v1470 = vsel %vm1078, %v1274, 0.0
        %v1471 = vsel %vm1079, %v1275, 0.0
        %v1472 = vsel %vm1080, %v1276, 0.0
        %v1473 = vsel %vm1081, %v1277, 0.0
        %v1474 = vsel %vm1082, %v1278, 0.0
        %v1475 = vsel %vm1083, %v1279, 0.0
        %v1476 = vsel %vm1084, %v1280, 0.0
        %v1477 = vsel %vm1085, %v1281, 0.0
        %v1478 = vsel %vm1086, %v1282, 0.0
        %v1479 = vsel %vm1087, %v1283, 0.0
        %v1480 = vsel %vm1088, %v1284, 0.0
        %v1481 = vsel %vm1089, %v1285, 0.0
        %v1482 = vsel %vm1090, %v1286, 0.0
        %v1483 = vsel %vm1091, %v1287, 0.0
        %v1484 = vsel %vm1092, %v1288, 0.0
        %v1485 = vsel %vm1093, %v1289, 0.0
        %v1486 = vsel %vm1094, %v1290, 0.0
        %v1487 = vsel %vm1095, %v1291, 0.0
        %v1488 = vsel %vm1096, %v1292, 0.0
        %v1489 = vsel %vm1097, %v1293, 0.0
        %v1490 = vsel %vm1098, %v1294, 0.0
        %v1491 = vsel %vm1099, %v1295, 0.0
        %v1492 = vsel %vm1100, %v1296, 0.0
        %v1493 = vsel %vm1101, %v1297, 0.0
        %v1494 = vsel %vm1102, %v1298, 0.0
        %v1495 = vsel %vm1103, %v1299, 0.0
        %v1496 = vsel %vm1104, %v1300, 0.0
        %v1497 = vsel %vm1105, %v1301, 0.0
        %v1498 = vsel %vm1106, %v1302, 0.0
        %v1499 = vsel %vm1107, %v1303, 0.0
        %v1500 = vsel %vm1108, %v1304, 0.0
        %v1501 = vsel %vm1109, %v1305, 0.0
        %v1502 = vsel %vm1110, %v1306, 0.0
        %v1503 = vsel %vm1111, %v1307, 0.0
        %v1504 = vsel %vm1112, %v1308, 0.0
        %v1505 = vsel %vm1113, %v1309, 0.0
        %v1506 = vsel %vm1114, %v1310, 0.0
        %v1507 = vsel %vm1115, %v1311, 0.0
        %v1508 = vsel %vm1116, %v1312, 0.0
        %v1509 = vsel %vm1117, %v1313, 0.0
        %v1510 = vsel %vm1118, %v1314, 0.0
        %v1511 = vsel %vm1119, %v1315, 0.0
        %v1512 = vsel %vm1120, %v1316, 0.0
        %v1513 = vsel %vm1121, %v1317, 0.0
        %v1514 = vsel %vm1122, %v1318, 0.0
        %v1515 = vsel %vm1123, %v1319, 0.0
        %v1516 = vsel %vm1124, %v1320, 0.0
        %v1517 = vsel %vm1125, %v1321, 0.0
        %v1518 = vsel %vm1126, %v1322, 0.0
        %v1519 = vsel %vm1127, %v1323, 0.0
        %v1520 = vsel %vm1128, %v1324, 0.0
        %v1521 = vsel %vm1129, %v1325, 0.0
        %v1522 = vsel %vm1130, %v1326, 0.0
        %v1523 = vsel %vm1131, %v1327, 0.0
        %v1524 = vsel %vm1132, %v1328, 0.0
        %v1525 = vsel %vm1133, %v1329, 0.0
        %v1526 = vsel %vm1134, %v1330, 0.0
        %v1527 = vsel %vm1135, %v1331, 0.0
        %v1528 = vsel %vm1136, %v1332, 0.0
        %v1529 = vsel %vm1137, %v1333, 0.0
        %v1530 = vsel %vm1138, %v1334, 0.0
        %v1531 = vsel %vm1139, %v1335, 0.0
        %v1532 = vsel %vm1140, %v1336, 0.0
        %v1533 = vsel %vm1141, %v1337, 0.0
        %v1534 = vsel %vm1142, %v1338, 0.0
        %v1535 = vsel %vm1143, %v1339, 0.0
        %v1536 = vsel %vm1144, %v1340, 0.0
        %v1537 = vsel %vm1145, %v1341, 0.0
        %v1538 = vsel %vm1146, %v1342, 0.0
        %v1539 = vsel %vm1147, %v1343, 0.0
        %v1540 = vsel %vm1148, %v1344, 0.0
        %v1541 = vsel %vm1149, %v1345, 0.0
        %v1542 = vsel %vm1150, %v1346, 0.0
        %v1543 = vsel %vm1151, %v1347, 0.0
        %v1544 = vsel %vm1152, %v1348, 0.0
        %v1545 = vsel %vm1153, %v1349, 0.0
        %v1546 = vsel %vm1154, %v1350, 0.0
        %v1547 = vsel %vm1155, %v1351, 0.0
        %v1548 = vsel %vm1156, %v1352, 0.0
        %v1549 = vsel %vm1157, %v1353, 0.0
        %v1550 = vsel %vm1158, %v1354, 0.0
        %v1551 = vsel %vm1159, %v1355, 0.0
        %v1552 = vsel %vm1160, %v1356, 0.0
        %v1553 = vsel %vm1161, %v1357, 0.0
        %v1554 = vsel %vm1162, %v1358, 0.0
        %v1555 = vsel %vm1163, %v1359, 0.0
        %v1556 = vsel %vm1164, %v1360, 0.0
        %v1557 = vsel %vm1165, %v1361, 0.0
        %v1558 = vsel %vm1166, %v1362, 0.0
        %v1559 = vsel %vm1167, %v1363, 0.0
        %v1560 = vsel %vm1168, %v1364, 0.0
        %v1561 = vsel %vm1169, %v1365, 0.0
        %v1562 = vsel %vm1170, %v1366, 0.0
        %v1563 = vsel %vm1171, %v1367, 0.0
        %v1564 = vsel %vm1172, %v1368, 0.0
        %v1565 = vsel %vm1173, %v1369, 0.0
        %v1566 = vsel %vm1174, %v1370, 0.0
        %v1567 = vsel %vm1175, %v1371, 0.0
        %v1568 = vsel %vm1176, %v1372, 0.0
        %v1569 = vsel %vm1177, %v1373, 0.0
        %v1570 = vsel %vm1178, %v1374, 0.0
        %v1571 = vsel %vm1179, %v1375, 0.0
        %v1572 = vsel %vm1180, %v1376, 0.0
        %v1573 = vsel %vm1181, %v1377, 0.0
        %v1574 = vsel %vm1182, %v1378, 0.0
        %v1575 = vsel %vm1183, %v1379, 0.0
        %v1576 = vsel %vm1184, %v1380, 0.0
        %v1577 = vsel %vm1185, %v1381, 0.0
        %v1578 = vsel %vm1186, %v1382, 0.0
        %v1579 = vsel %vm1187, %v1383, 0.0
        %v1580 = vsel %vm1188, %v1384, 0.0
        %v1581 = vsel %vm1189, %v1385, 0.0
        %v1582 = vsel %vm1190, %v1386, 0.0
        %v1583 = vsel %vm1191, %v1387, 0.0
        %v1584 = vsel %vm1192, %v1388, 0.0
        %v1585 = vsel %vm1193, %v1389, 0.0
        %v1586 = vsel %vm1194, %v1390, 0.0
        %v1587 = vsel %vm1195, %v1391, 0.0
        %v1588 = vsel %vm1196, %v1392, 0.0
        %v1589 = vsel %vm1197, %v1393, 0.0
        %v1590 = vsel %vm1198, %v1394, 0.0
        %v1591 = vsel %vm1199, %v1395, 0.0
        %v1592 = vsel %vm1200, %v1396, 0.0
        %v1593 = vsel %vm1201, %v1397, 0.0
        %v1594 = vsel %vm1202, %v1398, 0.0
        %v1595 = vsel %vm1203, %v1399, 0.0
        %v1596 = vsel %vm1204, %v1400, 0.0
        %v1597 = vsel %vm1205, %v1401, 0.0
        %v1598 = vsel %vm1206, %v1402, 0.0
        %v1599 = vsel %vm1207, %v1403, 0.0
        %v1600 = vsel %vm1208, %v1404, 0.0
        %v1601 = vsel %vm1209, %v1405, 0.0
        %v1602 = vsel %vm1210, %v1406, 0.0
        %v1603 = vsel %vm1211, %v1407, 0.0
        %v1604 = vsel %vm1212, %v1408, 0.0
        %v1605 = vsel %vm1213, %v1409, 0.0
        %v1606 = vsel %vm1214, %v1410, 0.0
        %v1607 = vsel %vm1215, %v1411, 0.0
        %v1608 = vsel %vm1216, %v1412, 0.0
        %v1609 = vsel %vm1217, %v1413, 0.0
        %v1610 = vsel %vm1218, %v1414, 0.0
        %v1611 = vsel %vm1219, %v1415, 0.0
        %v1612 = vsel %vm1220, %v1416, 0.0
        %v1613 = vsel %vm1221, %v1417, 0.0
        %v1614 = vsel %vm1222, %v1418, 0.0
        %v1615 = vsel %vm1223, %v1419, 0.0
        %v1616 = vsel %vm1224, %v1420, 0.0
        %v1617 = vsel %vm1225, %v1421, 0.0
        %v1618 = vsel %vm1226, %v1422, 0.0
        %v1619 = vsel %vm1227, %v1423, 0.0
        %v1620 = vsel %vm1228, %v1424, 0.0
        %v1621 = vsel %vm1229, %v1425, 0.0
        %v1622 = vsel %vm1230, %v1426, 0.0
        %v1623 = vsel %vm1231, %v1427, 0.0
        %v1624 = vsel %vm1232, %v1428, 0.0
        %v1625 = vsel %vm1233, %v1429, 0.0
        %v1626 = vsel %vm1234, %v1430, 0.0
        %v1627 = vld [vmem:[#allocation2] sm:$0xff]
        %v1628 = vmul.f32 %v1431, %v1431
        %v1629 = vmul.f32 %v1432, %v1432
        %v1630 = vmul.f32 %v1433, %v1433
        %v1631 = vmul.f32 %v1434, %v1434
        %v1632 = vmul.f32 %v1435, %v1435
        %v1633 = vmul.f32 %v1436, %v1436
        %v1634 = vmul.f32 %v1437, %v1437
        %v1635 = vmul.f32 %v1438, %v1438
        %v1636 = vmul.f32 %v1439, %v1439
        %v1637 = vmul.f32 %v1440, %v1440
        %v1638 = vmul.f32 %v1441, %v1441
        %v1639 = vmul.f32 %v1442, %v1442
        %v1640 = vmul.f32 %v1443, %v1443
        %v1641 = vmul.f32 %v1444, %v1444
        %v1642 = vmul.f32 %v1445, %v1445
        %v1643 = vmul.f32 %v1446, %v1446
        %v1644 = vmul.f32 %v1447, %v1447
        %v1645 = vmul.f32 %v1448, %v1448
        %v1646 = vmul.f32 %v1449, %v1449
        %v1647 = vmul.f32 %v1450, %v1450
        %v1648 = vmul.f32 %v1451, %v1451
        %v1649 = vmul.f32 %v1452, %v1452
        %v1650 = vmul.f32 %v1453, %v1453
        %v1651 = vmul.f32 %v1454, %v1454
        %v1652 = vmul.f32 %v1455, %v1455
        %v1653 = vmul.f32 %v1456, %v1456
        %v1654 = vmul.f32 %v1457, %v1457
        %v1655 = vmul.f32 %v1458, %v1458
        %v1656 = vmul.f32 %v1459, %v1459
        %v1657 = vmul.f32 %v1460, %v1460
        %v1658 = vmul.f32 %v1461, %v1461
        %v1659 = vmul.f32 %v1462, %v1462
        %v1660 = vmul.f32 %v1463, %v1463
        %v1661 = vmul.f32 %v1464, %v1464
        %v1662 = vmul.f32 %v1465, %v1465
        %v1663 = vmul.f32 %v1466, %v1466
        %v1664 = vmul.f32 %v1467, %v1467
        %v1665 = vmul.f32 %v1468, %v1468
        %v1666 = vmul.f32 %v1469, %v1469
        %v1667 = vmul.f32 %v1470, %v1470
        %v1668 = vmul.f32 %v1471, %v1471
        %v1669 = vmul.f32 %v1472, %v1472
        %v1670 = vmul.f32 %v1473, %v1473
        %v1671 = vmul.f32 %v1474, %v1474
        %v1672 = vmul.f32 %v1475, %v1475
        %v1673 = vmul.f32 %v1476, %v1476
        %v1674 = vmul.f32 %v1477, %v1477
        %v1675 = vmul.f32 %v1478, %v1478
        %v1676 = vmul.f32 %v1479, %v1479
        %v1677 = vmul.f32 %v1480, %v1480
        %v1678 = vmul.f32 %v1481, %v1481
        %v1679 = vmul.f32 %v1482, %v1482
        %v1680 = vmul.f32 %v1483, %v1483
        %v1681 = vmul.f32 %v1484, %v1484
        %v1682 = vmul.f32 %v1485, %v1485
        %v1683 = vmul.f32 %v1486, %v1486
        %v1684 = vmul.f32 %v1487, %v1487
        %v1685 = vmul.f32 %v1488, %v1488
        %v1686 = vmul.f32 %v1489, %v1489
        %v1687 = vmul.f32 %v1490, %v1490
        %v1688 = vmul.f32 %v1491, %v1491
        %v1689 = vmul.f32 %v1492, %v1492
        %v1690 = vmul.f32 %v1493, %v1493
        %v1691 = vmul.f32 %v1494, %v1494
        %v1692 = vmul.f32 %v1495, %v1495
        %v1693 = vmul.f32 %v1496, %v1496
        %v1694 = vmul.f32 %v1497, %v1497
        %v1695 = vmul.f32 %v1498, %v1498
        %v1696 = vmul.f32 %v1499, %v1499
        %v1697 = vmul.f32 %v1500, %v1500
        %v1698 = vmul.f32 %v1501, %v1501
        %v1699 = vmul.f32 %v1502, %v1502
        %v1700 = vmul.f32 %v1503, %v1503
        %v1701 = vmul.f32 %v1504, %v1504
        %v1702 = vmul.f32 %v1505, %v1505
        %v1703 = vmul.f32 %v1506, %v1506
        %v1704 = vmul.f32 %v1507, %v1507
        %v1705 = vmul.f32 %v1508, %v1508
        %v1706 = vmul.f32 %v1509, %v1509
        %v1707 = vmul.f32 %v1510, %v1510
        %v1708 = vmul.f32 %v1511, %v1511
        %v1709 = vmul.f32 %v1512, %v1512
        %v1710 = vmul.f32 %v1513, %v1513
        %v1711 = vmul.f32 %v1514, %v1514
        %v1712 = vmul.f32 %v1515, %v1515
        %v1713 = vmul.f32 %v1516, %v1516
        %v1714 = vmul.f32 %v1517, %v1517
        %v1715 = vmul.f32 %v1518, %v1518
        %v1716 = vmul.f32 %v1519, %v1519
        %v1717 = vmul.f32 %v1520, %v1520
        %v1718 = vmul.f32 %v1521, %v1521
        %v1719 = vmul.f32 %v1522, %v1522
        %v1720 = vmul.f32 %v1523, %v1523
        %v1721 = vmul.f32 %v1524, %v1524
        %v1722 = vmul.f32 %v1525, %v1525
        %v1723 = vmul.f32 %v1526, %v1526
        %v1724 = vmul.f32 %v1527, %v1527
        %v1725 = vmul.f32 %v1528, %v1528
        %v1726 = vmul.f32 %v1529, %v1529
        %v1727 = vmul.f32 %v1530, %v1530
        %v1728 = vmul.f32 %v1531, %v1531
        %v1729 = vmul.f32 %v1532, %v1532
        %v1730 = vmul.f32 %v1533, %v1533
        %v1731 = vmul.f32 %v1534, %v1534
        %v1732 = vmul.f32 %v1535, %v1535
        %v1733 = vmul.f32 %v1536, %v1536
        %v1734 = vmul.f32 %v1537, %v1537
        %v1735 = vmul.f32 %v1538, %v1538
        %v1736 = vmul.f32 %v1539, %v1539
        %v1737 = vmul.f32 %v1540, %v1540
        %v1738 = vmul.f32 %v1541, %v1541
        %v1739 = vmul.f32 %v1542, %v1542
        %v1740 = vmul.f32 %v1543, %v1543
        %v1741 = vmul.f32 %v1544, %v1544
        %v1742 = vmul.f32 %v1545, %v1545
        %v1743 = vmul.f32 %v1546, %v1546
        %v1744 = vmul.f32 %v1547, %v1547
        %v1745 = vmul.f32 %v1548, %v1548
        %v1746 = vmul.f32 %v1549, %v1549
        %v1747 = vmul.f32 %v1550, %v1550
        %v1748 = vmul.f32 %v1551, %v1551
        %v1749 = vmul.f32 %v1552, %v1552
        %v1750 = vmul.f32 %v1553, %v1553
        %v1751 = vmul.f32 %v1554, %v1554
        %v1752 = vmul.f32 %v1555, %v1555
        %v1753 = vmul.f32 %v1556, %v1556
        %v1754 = vmul.f32 %v1557, %v1557
        %v1755 = vmul.f32 %v1558, %v1558
        %v1756 = vmul.f32 %v1559, %v1559
        %v1757 = vmul.f32 %v1560, %v1560
        %v1758 = vmul.f32 %v1561, %v1561
        %v1759 = vmul.f32 %v1562, %v1562
        %v1760 = vmul.f32 %v1563, %v1563
        %v1761 = vmul.f32 %v1564, %v1564
        %v1762 = vmul.f32 %v1565, %v1565
        %v1763 = vmul.f32 %v1566, %v1566
        %v1764 = vmul.f32 %v1567, %v1567
        %v1765 = vmul.f32 %v1568, %v1568
        %v1766 = vmul.f32 %v1569, %v1569
        %v1767 = vmul.f32 %v1570, %v1570
        %v1768 = vmul.f32 %v1571, %v1571
        %v1769 = vmul.f32 %v1572, %v1572
        %v1770 = vmul.f32 %v1573, %v1573
        %v1771 = vmul.f32 %v1574, %v1574
        %v1772 = vmul.f32 %v1575, %v1575
        %v1773 = vmul.f32 %v1576, %v1576
        %v1774 = vmul.f32 %v1577, %v1577
        %v1775 = vmul.f32 %v1578, %v1578
        %v1776 = vmul.f32 %v1579, %v1579
        %v1777 = vmul.f32 %v1580, %v1580
        %v1778 = vmul.f32 %v1581, %v1581
        %v1779 = vmul.f32 %v1582, %v1582
        %v1780 = vmul.f32 %v1583, %v1583
        %v1781 = vmul.f32 %v1584, %v1584
        %v1782 = vmul.f32 %v1585, %v1585
        %v1783 = vmul.f32 %v1586, %v1586
        %v1784 = vmul.f32 %v1587, %v1587
        %v1785 = vmul.f32 %v1588, %v1588
        %v1786 = vmul.f32 %v1589, %v1589
        %v1787 = vmul.f32 %v1590, %v1590
        %v1788 = vmul.f32 %v1591, %v1591
        %v1789 = vmul.f32 %v1592, %v1592
        %v1790 = vmul.f32 %v1593, %v1593
        %v1791 = vmul.f32 %v1594, %v1594
        %v1792 = vmul.f32 %v1595, %v1595
        %v1793 = vmul.f32 %v1596, %v1596
        %v1794 = vmul.f32 %v1597, %v1597
        %v1795 = vmul.f32 %v1598, %v1598
        %v1796 = vmul.f32 %v1599, %v1599
        %v1797 = vmul.f32 %v1600, %v1600
        %v1798 = vmul.f32 %v1601, %v1601
        %v1799 = vmul.f32 %v1602, %v1602
        %v1800 = vmul.f32 %v1603, %v1603
        %v1801 = vmul.f32 %v1604, %v1604
        %v1802 = vmul.f32 %v1605, %v1605
        %v1803 = vmul.f32 %v1606, %v1606
        %v1804 = vmul.f32 %v1607, %v1607
        %v1805 = vmul.f32 %v1608, %v1608
        %v1806 = vmul.f32 %v1609, %v1609
        %v1807 = vmul.f32 %v1610, %v1610
        %v1808 = vmul.f32 %v1611, %v1611
        %v1809 = vmul.f32 %v1612, %v1612
        %v1810 = vmul.f32 %v1613, %v1613
        %v1811 = vmul.f32 %v1614, %v1614
        %v1812 = vmul.f32 %v1615, %v1615
        %v1813 = vmul.f32 %v1616, %v1616
        %v1814 = vmul.f32 %v1617, %v1617
        %v1815 = vmul.f32 %v1618, %v1618
        %v1816 = vmul.f32 %v1619, %v1619
        %v1817 = vmul.f32 %v1620, %v1620
        %v1818 = vmul.f32 %v1621, %v1621
        %v1819 = vmul.f32 %v1622, %v1622
        %v1820 = vmul.f32 %v1623, %v1623
        %v1821 = vmul.f32 %v1624, %v1624
        %v1822 = vmul.f32 %v1625, %v1625
        %v1823 = vmul.f32 %v1626, %v1626
        %v1824 = vadd.f32 %v1628, %v1629
        %v1825 = vadd.f32 %v1824, %v1630
        %v1826 = vadd.f32 %v1825, %v1631
        %v1827 = vadd.f32 %v1826, %v1632
        %v1828 = vadd.f32 %v1827, %v1633
        %v1829 = vadd.f32 %v1828, %v1634
        %v1830 = vadd.f32 %v1829, %v1635
        %v1831 = vadd.f32 %v1830, %v1636
        %v1832 = vadd.f32 %v1831, %v1637
        %v1833 = vadd.f32 %v1832, %v1638
        %v1834 = vadd.f32 %v1833, %v1639
        %v1835 = vadd.f32 %v1834, %v1640
        %v1836 = vadd.f32 %v1835, %v1641
        %v1837 = vadd.f32 %v1836, %v1642
        %v1838 = vadd.f32 %v1837, %v1643
        %v1839 = vadd.f32 %v1838, %v1644
        %v1840 = vadd.f32 %v1839, %v1645
        %v1841 = vadd.f32 %v1840, %v1646
        %v1842 = vadd.f32 %v1841, %v1647
        %v1843 = vadd.f32 %v1842, %v1648
        %v1844 = vadd.f32 %v1843, %v1649
        %v1845 = vadd.f32 %v1844, %v1650
        %v1846 = vadd.f32 %v1845, %v1651
        %v1847 = vadd.f32 %v1846, %v1652
        %v1848 = vadd.f32 %v1847, %v1653
        %v1849 = vadd.f32 %v1848, %v1654
        %v1850 = vadd.f32 %v1849, %v1655
        %v1851 = vadd.f32 %v1850, %v1656
        %v1852 = vadd.f32 %v1851, %v1657
        %v1853 = vadd.f32 %v1852, %v1658
        %v1854 = vadd.f32 %v1853, %v1659
        %v1855 = vadd.f32 %v1854, %v1660
        %v1856 = vadd.f32 %v1855, %v1661
        %v1857 = vadd.f32 %v1856, %v1662
        %v1858 = vadd.f32 %v1857, %v1663
        %v1859 = vadd.f32 %v1858, %v1664
        %v1860 = vadd.f32 %v1859, %v1665
        %v1861 = vadd.f32 %v1860, %v1666
        %v1862 = vadd.f32 %v1861, %v1667
        %v1863 = vadd.f32 %v1862, %v1668
        %v1864 = vadd.f32 %v1863, %v1669
        %v1865 = vadd.f32 %v1864, %v1670
        %v1866 = vadd.f32 %v1865, %v1671
        %v1867 = vadd.f32 %v1866, %v1672
        %v1868 = vadd.f32 %v1867, %v1673
        %v1869 = vadd.f32 %v1868, %v1674
        %v1870 = vadd.f32 %v1869, %v1675
        %v1871 = vadd.f32 %v1870, %v1676
        %v1872 = vadd.f32 %v1871, %v1677
        %v1873 = vadd.f32 %v1872, %v1678
        %v1874 = vadd.f32 %v1873, %v1679
        %v1875 = vadd.f32 %v1874, %v1680
        %v1876 = vadd.f32 %v1875, %v1681
        %v1877 = vadd.f32 %v1876, %v1682
        %v1878 = vadd.f32 %v1877, %v1683
        %v1879 = vadd.f32 %v1878, %v1684
        %v1880 = vadd.f32 %v1879, %v1685
        %v1881 = vadd.f32 %v1880, %v1686
        %v1882 = vadd.f32 %v1881, %v1687
        %v1883 = vadd.f32 %v1882, %v1688
        %v1884 = vadd.f32 %v1883, %v1689
        %v1885 = vadd.f32 %v1884, %v1690
        %v1886 = vadd.f32 %v1885, %v1691
        %v1887 = vadd.f32 %v1886, %v1692
        %v1888 = vadd.f32 %v1887, %v1693
        %v1889 = vadd.f32 %v1888, %v1694
        %v1890 = vadd.f32 %v1889, %v1695
        %v1891 = vadd.f32 %v1890, %v1696
        %v1892 = vadd.f32 %v1891, %v1697
        %v1893 = vadd.f32 %v1892, %v1698
        %v1894 = vadd.f32 %v1893, %v1699
        %v1895 = vadd.f32 %v1894, %v1700
        %v1896 = vadd.f32 %v1895, %v1701
        %v1897 = vadd.f32 %v1896, %v1702
        %v1898 = vadd.f32 %v1897, %v1703
        %v1899 = vadd.f32 %v1898, %v1704
        %v1900 = vadd.f32 %v1899, %v1705
        %v1901 = vadd.f32 %v1900, %v1706
        %v1902 = vadd.f32 %v1901, %v1707
        %v1903 = vadd.f32 %v1902, %v1708
        %v1904 = vadd.f32 %v1903, %v1709
        %v1905 = vadd.f32 %v1904, %v1710
        %v1906 = vadd.f32 %v1905, %v1711
        %v1907 = vadd.f32 %v1906, %v1712
        %v1908 = vadd.f32 %v1907, %v1713
        %v1909 = vadd.f32 %v1908, %v1714
        %v1910 = vadd.f32 %v1909, %v1715
        %v1911 = vadd.f32 %v1910, %v1716
        %v1912 = vadd.f32 %v1911, %v1717
        %v1913 = vadd.f32 %v1912, %v1718
        %v1914 = vadd.f32 %v1913, %v1719
        %v1915 = vadd.f32 %v1914, %v1720
        %v1916 = vadd.f32 %v1915, %v1721
        %v1917 = vadd.f32 %v1916, %v1722
        %v1918 = vadd.f32 %v1917, %v1723
        %v1919 = vadd.f32 %v1918, %v1724
        %v1920 = vadd.f32 %v1919, %v1725
        %v1921 = vadd.f32 %v1920, %v1726
        %v1922 = vadd.f32 %v1921, %v1727
        %v1923 = vadd.f32 %v1922, %v1728
        %v1924 = vadd.f32 %v1923, %v1729
        %v1925 = vadd.f32 %v1924, %v1730
        %v1926 = vadd.f32 %v1925, %v1731
        %v1927 = vadd.f32 %v1926, %v1732
        %v1928 = vadd.f32 %v1927, %v1733
        %v1929 = vadd.f32 %v1928, %v1734
        %v1930 = vadd.f32 %v1929, %v1735
        %v1931 = vadd.f32 %v1930, %v1736
        %v1932 = vadd.f32 %v1931, %v1737
        %v1933 = vadd.f32 %v1932, %v1738
        %v1934 = vadd.f32 %v1933, %v1739
        %v1935 = vadd.f32 %v1934, %v1740
        %v1936 = vadd.f32 %v1935, %v1741
        %v1937 = vadd.f32 %v1936, %v1742
        %v1938 = vadd.f32 %v1937, %v1743
        %v1939 = vadd.f32 %v1938, %v1744
        %v1940 = vadd.f32 %v1939, %v1745
        %v1941 = vadd.f32 %v1940, %v1746
        %v1942 = vadd.f32 %v1941, %v1747
        %v1943 = vadd.f32 %v1942, %v1748
        %v1944 = vadd.f32 %v1943, %v1749
        %v1945 = vadd.f32 %v1944, %v1750
        %v1946 = vadd.f32 %v1945, %v1751
        %v1947 = vadd.f32 %v1946, %v1752
        %v1948 = vadd.f32 %v1947, %v1753
        %v1949 = vadd.f32 %v1948, %v1754
        %v1950 = vadd.f32 %v1949, %v1755
        %v1951 = vadd.f32 %v1950, %v1756
        %v1952 = vadd.f32 %v1951, %v1757
        %v1953 = vadd.f32 %v1952, %v1758
        %v1954 = vadd.f32 %v1953, %v1759
        %v1955 = vadd.f32 %v1954, %v1760
        %v1956 = vadd.f32 %v1955, %v1761
        %v1957 = vadd.f32 %v1956, %v1762
        %v1958 = vadd.f32 %v1957, %v1763
        %v1959 = vadd.f32 %v1958, %v1764
        %v1960 = vadd.f32 %v1959, %v1765
        %v1961 = vadd.f32 %v1960, %v1766
        %v1962 = vadd.f32 %v1961, %v1767
        %v1963 = vadd.f32 %v1962, %v1768
        %v1964 = vadd.f32 %v1963, %v1769
        %v1965 = vadd.f32 %v1964, %v1770
        %v1966 = vadd.f32 %v1965, %v1771
        %v1967 = vadd.f32 %v1966, %v1772
        %v1968 = vadd.f32 %v1967, %v1773
        %v1969 = vadd.f32 %v1968, %v1774
        %v1970 = vadd.f32 %v1969, %v1775
        %v1971 = vadd.f32 %v1970, %v1776
        %v1972 = vadd.f32 %v1971, %v1777
        %v1973 = vadd.f32 %v1972, %v1778
        %v1974 = vadd.f32 %v1973, %v1779
        %v1975 = vadd.f32 %v1974, %v1780
        %v1976 = vadd.f32 %v1975, %v1781
        %v1977 = vadd.f32 %v1976, %v1782
        %v1978 = vadd.f32 %v1977, %v1783
        %v1979 = vadd.f32 %v1978, %v1784
        %v1980 = vadd.f32 %v1979, %v1785
        %v1981 = vadd.f32 %v1980, %v1786
        %v1982 = vadd.f32 %v1981, %v1787
        %v1983 = vadd.f32 %v1982, %v1788
        %v1984 = vadd.f32 %v1983, %v1789
        %v1985 = vadd.f32 %v1984, %v1790
        %v1986 = vadd.f32 %v1985, %v1791
        %v1987 = vadd.f32 %v1986, %v1792
        %v1988 = vadd.f32 %v1987, %v1793
        %v1989 = vadd.f32 %v1988, %v1794
        %v1990 = vadd.f32 %v1989, %v1795
        %v1991 = vadd.f32 %v1990, %v1796
        %v1992 = vadd.f32 %v1991, %v1797
        %v1993 = vadd.f32 %v1992, %v1798
        %v1994 = vadd.f32 %v1993, %v1799
        %v1995 = vadd.f32 %v1994, %v1800
        %v1996 = vadd.f32 %v1995, %v1801
        %v1997 = vadd.f32 %v1996, %v1802
        %v1998 = vadd.f32 %v1997, %v1803
        %v1999 = vadd.f32 %v1998, %v1804
        %v2000 = vadd.f32 %v1999, %v1805
        %v2001 = vadd.f32 %v2000, %v1806
        %v2002 = vadd.f32 %v2001, %v1807
        %v2003 = vadd.f32 %v2002, %v1808
        %v2004 = vadd.f32 %v2003, %v1809
        %v2005 = vadd.f32 %v2004, %v1810
        %v2006 = vadd.f32 %v2005, %v1811
        %v2007 = vadd.f32 %v2006, %v1812
        %v2008 = vadd.f32 %v2007, %v1813
        %v2009 = vadd.f32 %v2008, %v1814
        %v2010 = vadd.f32 %v2009, %v1815
        %v2011 = vadd.f32 %v2010, %v1816
        %v2012 = vadd.f32 %v2011, %v1817
        %v2013 = vadd.f32 %v2012, %v1818
        %v2014 = vadd.f32 %v2013, %v1819
        %v2015 = vadd.f32 %v2014, %v1820
        %v2016 = vadd.f32 %v2015, %v1821
        %v2017 = vadd.f32 %v2016, %v1822
        %v2018 = vadd.f32 %v2017, %v1823
        %v2019 = vadd.f32 %v1627, %v2018
        %2020 = vst [vmem:[#allocation2] sm:$0xff] %v2019
        %p2021 = scmp.eq.s32.totalorder %s25, 1
        // Predicated region
        $region41: #{tpu_custom_call.1} parent=27 // pred_check
          %p2022 = pneg %p2021
        $region42: #{tpu_custom_call.1} parent=27 // pred_check_branch
          %2024 = sbr.rel (%p2022) target = $region44
        $region43: #{tpu_custom_call.1} parent=27 // pred_region
          %v2025 = vld [vmem:[#allocation2] sm:$0xff]
          %2026 = vst [vmem:[#allocation8] sm:$0xff] %v2025
        $region44: #{tpu_custom_call.1} parent=27 // pred_fallthru
          _
        // Predicated region
        $region45: #{tpu_custom_call.1} parent=27 // pred_check
          %p2027 = pneg %p110
        $region46: #{tpu_custom_call.1} parent=27 // pred_check_branch
          %2029 = sbr.rel (%p2027) target = $region48
        $region47: #{tpu_custom_call.1} parent=27 // pred_region
          %s2031 = ssub.s32 128, 128
          %2032 = vsyncadd [#allocation5], %s2031
          %s2033 = smul.addr %s24, 128
          %s2034 = scalar_lea.hbm %s2, %s2033
          %s2036 = sshll.u32 [#allocation8], 4
          %s2037 = int_to_ptr.vmem [resolvable:$true] %s2036
          %2039 = dma.vmem_to_hbm [thread:$0]  %s2037, 128, %s2034, [#allocation5]
        $region48: #{tpu_custom_call.1} parent=27 // pred_fallthru
          _
        // Predicated region
        $region49: #{tpu_custom_call.1} parent=27 // pred_check
          %p2040 = pneg %p110
        $region50: #{tpu_custom_call.1} parent=27 // pred_check_branch
          %2042 = sbr.rel (%p2040) target = $region52
        $region51: #{tpu_custom_call.1} parent=27 // pred_region
          %2043 = dma.done [#allocation5], 128
        $region52: #{tpu_custom_call.1} parent=27 // pred_fallthru
          _
      $region28: #{tpu_custom_call.1} parent=5 // pred_fallthru
        _
      %p2044 = scmp.le.s32.totalorder 2, %s15
      // Predicated region
      $region53: #{tpu_custom_call.1} parent=5 // pred_check
        %p2045 = pneg %p2044
      $region54: #{tpu_custom_call.1} parent=5 // pred_check_branch
        %2047 = sbr.rel (%p2045) target = $region56
      $region55: #{tpu_custom_call.1} parent=5 // pred_region
        %s2048 = ssub.s32 %s15, 2
      $region56: #{tpu_custom_call.1} parent=5 // pred_fallthru
        _
    $region6: #{tpu_custom_call.1} parent=1 // loop_footer
      %s19 = sadd.s32 1, %s15
    $region7: #{tpu_custom_call.1} parent=1 // loop_footer_branch
      %14 = sbr.rel target = $region3
    $region8: #{tpu_custom_call.1} parent=1 // loop_exit
      _
    %2049 = vsyncpa [#allocation4], 1
    %s2050 = scalar_lea.sflag [#allocation4], 1
    %2051 = vsyncpa %s2050, 1
    %2052 = vsyncpa [#allocation7], 1
    %s2053 = scalar_lea.sflag [#allocation7], 1
    %2054 = vsyncpa %s2053, 1
    %2055 = vsyncpa [#allocation5], 1
    %s2056 = scalar_lea.sflag [#allocation5], 1
    %2057 = vsyncpa %s2056, 1

</llo_original>
